<compile_context>
chip_gen: v5e
topology: v5e:2x2
jax: 0.10.0
libtpu: 0.0.40
codegen_flags: <defaults>
</compile_context>

<pallas_src>
import functools
import math

import jax
import jax.numpy as jnp
from jax import lax
from jax.experimental import pallas as pl
from jax.experimental.pallas import tpu as pltpu

MASK_VALUE = -1000000.0


# ----------------------------------------------------------------------------
# Kernel
# ----------------------------------------------------------------------------
def _attn_kernel(vm_ref, q_ref, k_ref, v_ref, wp_ref, bp_ref, o_ref, y_scr,
                 *, heads_per_group, n_groups, mask_value, compute_dtype,
                 exact_recip):
    """One grid step == (batch b, query tile qi, head group g).

    vm_ref : (1, 1, T)         key validity (0.0 => padded key), f32
    q_ref  : (1, hpg, TQ, D)   query rows for this tile/group (scale folded in)
    k_ref  : (1, hpg, T,  D)   keys for this head group, full key length
    v_ref  : (1, hpg, T,  D)   values for this head group
    wp_ref : (C, C)            output projection (resident)
    bp_ref : (1, C)            output bias, f32
    o_ref  : (1, TQ, C)        output tile (written at the last head group)
    y_scr  : (G, TQ, hpg*D)    VMEM scratch: per-group attention outputs
    """
    TQ = q_ref.shape[2]
    T = k_ref.shape[2]
    qi = pl.program_id(1)
    g = pl.program_id(2)

    # Causal + key-padding mask, rebuilt in-kernel (no (B,T,T) HBM mask).
    rows = lax.broadcasted_iota(jnp.int32, (TQ, T), 0) + qi * TQ
    cols = lax.broadcasted_iota(jnp.int32, (TQ, T), 1)
    keep = (cols <= rows) & (vm_ref[0] != 0.0)                    # (TQ, T) bool

    ys = []
    for j in range(heads_per_group):                              # hpg is small (<= 128//D)
        q_h = q_ref[0, j]                                         # (TQ, D)
        k_h = k_ref[0, j]                                         # (T, D)
        v_h = v_ref[0, j]                                         # (T, D)

        # att[t, s] = q[t] . k[s]  (scale already folded into the Q projection)
        att = lax.dot_general(q_h, k_h, (((1,), (1,)), ((), ())),
                              preferred_element_type=jnp.float32)  # (TQ, T) f32
        # single masked_fill (causal + key padding) == PyTorch semantics
        att = jnp.where(keep, att, mask_value)

        # softmax over keys, f32
        att = att - jnp.max(att, axis=-1, keepdims=True)
        p = jnp.exp(att)
        denom = jnp.sum(p, axis=-1, keepdims=True)
        if exact_recip:                                           # f32 path: exact
            p = p / denom
        else:                                                     # bf16 path: EUP slot
            p = p * pl.reciprocal(denom, approx=True)

        y_h = jnp.dot(p.astype(compute_dtype), v_h,
                      preferred_element_type=jnp.float32)         # (TQ, D) f32
        ys.append(y_h.astype(compute_dtype))

    # one lane-dense slab per group (width hpg*D, 128 lanes for D=64 pairs)
    y_slab = ys[0] if len(ys) == 1 else jnp.concatenate(ys, axis=-1)

    if n_groups == 1:
        y_scr[0] = y_slab
    else:
        y_scr[g] = y_slab                                         # leading-dim store

    def _finalize():
        if n_groups == 1:
            y_full = y_scr[0]                                     # (TQ, C)
        else:
            y_full = jnp.concatenate([y_scr[j] for j in range(n_groups)],
                                     axis=-1)                     # (TQ, C)
        out = jnp.dot(y_full, wp_ref[...],
                      preferred_element_type=jnp.float32) + bp_ref[...]
        o_ref[0] = out.astype(o_ref.dtype)

    if n_groups == 1:
        _finalize()
    else:
        pl.when(g == n_groups - 1)(_finalize)


# ----------------------------------------------------------------------------
# Wrapper helpers
# ----------------------------------------------------------------------------
def _vmem_limit_bytes():
    """Generation-aware scoped-VMEM limit (56 MiB on v7x, ~112 MiB on v5e/v6e)."""
    cap = None
    try:
        cap = getattr(pltpu.get_tpu_info(), "vmem_capacity_bytes", None)
    except Exception:
        cap = None
    if not cap:
        kind = ""
        try:
            kind = jax.devices()[0].device_kind.lower()
        except Exception:
            pass
        cap = 64 * 1024 * 1024 if "7" in kind else 128 * 1024 * 1024
    return max(32 * 1024 * 1024, min(int(cap) * 7 // 8, 112 * 1024 * 1024))


def _default_q_block(T):
    """256 on 256-wide-MXU parts (v6e/v7x), 128 on v5e-and-older, else T."""
    kind = ""
    try:
        kind = jax.devices()[0].device_kind.lower()
    except Exception:
        pass
    small_mxu = any(v in kind for v in ("v2", "v3", "v4", "v5"))
    if not small_mxu and T % 256 == 0:
        return 256
    if T % 128 == 0:
        return 128
    return T


def _head_group(n_head, head_dim):
    """Largest divisor of n_head with group lane width hpg*head_dim <= 128."""
    cand = max(1, 128 // head_dim) if head_dim <= 128 else 1
    cand = min(cand, n_head)
    for c in range(cand, 0, -1):
        if n_head % c == 0:
            return c
    return 1


def _build_call(B, T, C, H, D, hpg, n_groups, TQ, GW, out_dtype, cdt,
                mask_value, exact_recip, *, single_buffer_weights):
    kernel = functools.partial(
        _attn_kernel, heads_per_group=hpg, n_groups=n_groups,
        mask_value=mask_value, compute_dtype=cdt, exact_recip=exact_recip)

    w_kwargs = {}
    if single_buffer_weights:
        # Weight block index never changes -> single buffer halves its VMEM.
        w_kwargs = dict(pipeline_mode=pl.Buffered(1))

    cdt_bytes = jnp.dtype(cdt).itemsize
    cost = pl.CostEstimate(
        flops=int(4 * B * T * T * C + 2 * B * T * C * C),
        transcendentals=int(B * H * T * T),
        bytes_accessed=int(3 * B * T * C * cdt_bytes + B * T * 4
                           + C * C * cdt_bytes + C * 4
                           + B * T * C * jnp.dtype(out_dtype).itemsize))

    grid_spec = pltpu.PrefetchScalarGridSpec(
        num_scalar_prefetch=0,
        grid=(B, T // TQ, n_groups),
        in_specs=[
            pl.BlockSpec((1, 1, T), lambda b, qi, g: (b, 0, 0)),            # key validity
            pl.BlockSpec((1, hpg, TQ, D), lambda b, qi, g: (b, g, qi, 0)),  # Q tile/group
            pl.BlockSpec((1, hpg, T, D), lambda b, qi, g: (b, g, 0, 0)),    # K group
            pl.BlockSpec((1, hpg, T, D), lambda b, qi, g: (b, g, 0, 0)),    # V group
            pl.BlockSpec((C, C), lambda b, qi, g: (0, 0), **w_kwargs),      # Wp
            pl.BlockSpec((1, C), lambda b, qi, g: (0, 0), **w_kwargs),      # bp
        ],
        out_specs=pl.BlockSpec((1, TQ, C), lambda b, qi, g: (b, qi, 0)),
        scratch_shapes=[pltpu.VMEM((n_groups, TQ, GW), cdt)],
    )
    return pl.pallas_call(
        kernel,
        out_shape=jax.ShapeDtypeStruct((B, T, C), out_dtype),
        grid_spec=grid_spec,
        compiler_params=pltpu.CompilerParams(
            dimension_semantics=("parallel", "parallel", "arbitrary"),
            vmem_limit_bytes=_vmem_limit_bytes()),
        cost_estimate=cost,
    )


# ----------------------------------------------------------------------------
# Public entry point
# ----------------------------------------------------------------------------
def causal_self_attention(x, valid_input_mask, params, n_head,
                          mask_value=MASK_VALUE,
                          compute_dtype=jnp.bfloat16,
                          q_block=None):
    """x: (B, T, C) f32; valid_input_mask: (B, T) (0 => padded key) or None.

    Equivalent to the PyTorch module's forward (eval mode) with a causal
    attn_mask plus the key-padding valid_input_mask; the causal part is rebuilt
    inside the kernel.
    """
    B, T, C = x.shape
    assert C % n_head == 0
    D = C // n_head
    scale = 1.0 / math.sqrt(D)
    cdt = jnp.dtype(compute_dtype)
    exact_recip = cdt == jnp.dtype(jnp.float32)

    if q_block is None:
        q_block = _default_q_block(T)
    q_block = min(q_block, T)
    assert T % q_block == 0, "q_block must divide T"

    hpg = _head_group(n_head, D)
    n_groups = n_head // hpg
    GW = hpg * D

    # ---- Q/K/V projections: ONE XLA matmul over (B*T, C) @ (C, 3C) ----------
    # (fixes the per-query-tile KV recompute; 1/sqrt(D) folded into Wq/bq).
    # torch Linear: y = x @ W.T + b with W: (C_out, C_in).
    w_qkv = jnp.concatenate([params["Wq"].T * scale, params["Wk"].T,
                             params["Wv"].T], axis=1)                # (C, 3C)
    b_qkv = jnp.concatenate([params["bq"] * scale, params["bk"],
                             params["bv"]])                          # (3C,)
    qkv = (x.reshape(B * T, C) @ w_qkv + b_qkv).reshape(B, T, 3, n_head, D)
    qkv = qkv.transpose(2, 0, 3, 1, 4).astype(cdt)                   # (3, B, H, T, D)
    q_hm, k_hm, v_hm = qkv[0], qkv[1], qkv[2]

    if valid_input_mask is None:
        vm3 = jnp.ones((B, 1, T), jnp.float32)
    else:
        vm3 = valid_input_mask.reshape(B, 1, T).astype(jnp.float32)

    wp = params["Wp"].T.astype(cdt)                                  # (C, C)
    bp = params["bp"].reshape(1, C).astype(jnp.float32)              # (1, C)

    args = (vm3, q_hm, k_hm, v_hm, wp, bp)
    build = functools.partial(_build_call, B, T, C, n_head, D, hpg, n_groups,
                              q_block, GW, x.dtype, cdt, mask_value,
                              exact_recip)
    try:
        return build(single_buffer_weights=True)(*args)
    except Exception:
        # pipeline_mode=pl.Buffered(1) not supported on this jax -> default buffering.
        return build(single_buffer_weights=False)(*args)


# ----------------------------------------------------------------------------
# Pure-JAX reference (PyTorch forward, eval mode) and self-test
# ----------------------------------------------------------------------------
def _reference(x, attn_mask, valid_input_mask, params, n_head):
    B, T, C = x.shape
    D = C // n_head

    def lin(t, W, b):
        return t @ W.T + b

    k = lin(x, params["Wk"], params["bk"]).reshape(B, T, n_head, D).transpose(0, 2, 1, 3)
    q = lin(x, params["Wq"], params["bq"]).reshape(B, T, n_head, D).transpose(0, 2, 1, 3)
    v = lin(x, params["Wv"], params["bv"]).reshape(B, T, n_head, D).transpose(0, 2, 1, 3)
    att = jnp.einsum("bhtd,bhsd->bhts", q, k) * (1.0 / math.sqrt(D))
    att = jnp.where(attn_mask[:, None, :, :] == 0, MASK_VALUE, att)
    att = jnp.where(valid_input_mask[:, None, None, :] == 0, MASK_VALUE, att)
    att = jax.nn.softmax(att, axis=-1)
    y = jnp.einsum("bhts,bhsd->bhtd", att, v)
    y = y.transpose(0, 2, 1, 3).reshape(B, T, C)
    return lin(y, params["Wp"], params["bp"])


if __name__ == "__main__":
    B, T, C, H = 2, 8, 32, 4

    key = jax.random.PRNGKey(0)
    ks = jax.random.split(key, 10)
    s = 1.0 / math.sqrt(C)
    params = {
        "Wq": jax.random.uniform(ks[0], (C, C), jnp.float32, -s, s),
        "bq": jax.random.uniform(ks[1], (C,), jnp.float32, -s, s),
        "Wk": jax.random.uniform(ks[2], (C, C), jnp.float32, -s, s),
        "bk": jax.random.uniform(ks[3], (C,), jnp.float32, -s, s),
        "Wv": jax.random.uniform(ks[4], (C, C), jnp.float32, -s, s),
        "bv": jax.random.uniform(ks[5], (C,), jnp.float32, -s, s),
        "Wp": jax.random.uniform(ks[6], (C, C), jnp.float32, -s, s),
        "bp": jax.random.uniform(ks[7], (C,), jnp.float32, -s, s),
    }

    x = jax.random.normal(ks[8], (B, T, C), jnp.float32)
    # key-padding mask (B, T): last 2 tokens padded
    valid = jnp.ones((B, T), jnp.float32).at[:, T - 2:].set(0.0)

    # reference = PyTorch semantics with a causal attn_mask + valid_input_mask
    causal = jnp.tril(jnp.ones((T, T), jnp.float32))
    attn_mask = jnp.broadcast_to(causal, (B, T, T))
    ref = _reference(x, attn_mask, valid, params, H)

    # 1) exact-semantics check (f32 matmul inputs, exact reciprocal)
    out_f32 = causal_self_attention(x, valid, params, H, compute_dtype=jnp.float32)
    out_f32 = jax.block_until_ready(out_f32)
    assert out_f32.shape == (B, T, C)
    assert jnp.allclose(out_f32, ref, atol=1e-2, rtol=1e-2), "f32 mismatch vs reference"

    # 2) fast path: bf16 MXU inputs, f32 accumulation, approx EUP reciprocal
    out_bf16 = causal_self_attention(x, valid, params, H, compute_dtype=jnp.bfloat16)
    out_bf16 = jax.block_until_ready(out_bf16)
    assert out_bf16.shape == (B, T, C)
    assert jnp.allclose(out_bf16, ref, atol=5e-2, rtol=5e-2), "bf16 mismatch vs reference"

    print("KERNEL_OK")
</pallas_src>

<mosaic_0001>
module attributes {stable_mosaic.version = 11 : i64} {
  func.func @_attn_kernel(%arg0: i32, %arg1: i32, %arg2: i32, %arg3: memref<1x1x8xf32, #tpu.memory_space<vmem>>, %arg4: memref<1x4x8x8xf32, #tpu.memory_space<vmem>>, %arg5: memref<1x4x8x8xf32, #tpu.memory_space<vmem>>, %arg6: memref<1x4x8x8xf32, #tpu.memory_space<vmem>>, %arg7: memref<32x32xf32, #tpu.memory_space<vmem>>, %arg8: memref<1x32xf32, #tpu.memory_space<vmem>>, %arg9: memref<1x8x32xf32, #tpu.memory_space<vmem>>, %arg10: memref<1x8x32xf32, #tpu.memory_space<vmem>>) attributes {dimension_semantics = [#tpu.dimension_semantics<parallel>, #tpu.dimension_semantics<parallel>, #tpu.dimension_semantics<arbitrary>], iteration_bounds = array<i64: 2, 1, 1>, scalar_prefetch = 0 : i64, scratch_operands = 1 : i64, tpu.core_type = #tpu.core_type<tc>, window_params = [{transform_indices = @transform_0, window_bounds = array<i64: 1, 1, 8>}, {transform_indices = @transform_1, window_bounds = array<i64: 1, 4, 8, 8>}, {transform_indices = @transform_2, window_bounds = array<i64: 1, 4, 8, 8>}, {transform_indices = @transform_3, window_bounds = array<i64: 1, 4, 8, 8>}, {pipeline_mode = #tpu.pipeline_mode<synchronous>, transform_indices = @transform_4, window_bounds = array<i64: 32, 32>}, {pipeline_mode = #tpu.pipeline_mode<synchronous>, transform_indices = @transform_5, window_bounds = array<i64: 1, 32>}, {transform_indices = @transform_6, window_bounds = array<i64: 1, 8, 32>}]} {
    %0 = tpu.iota {dimensions = array<i32: 0>} : vector<8x8xi32>
    %c8_i32 = arith.constant 8 : i32
    %1 = arith.muli %arg1, %c8_i32 : i32
    %2 = vector.broadcast %1 : i32 to vector<8x8xi32>
    %3 = arith.addi %0, %2 : vector<8x8xi32>
    %4 = tpu.iota {dimensions = array<i32: 1>} : vector<8x8xi32>
    %5 = arith.cmpi sle, %4, %3 : vector<8x8xi32>
    %c0 = arith.constant 0 : index
    %c0_0 = arith.constant 0 : index
    %c0_1 = arith.constant 0 : index
    %6 = vector.load %arg3[%c0, %c0_0, %c0_1] : memref<1x1x8xf32, #tpu.memory_space<vmem>>, vector<1x1x8xf32>
    %7 = vector.shape_cast %6 : vector<1x1x8xf32> to vector<1x8xf32>
    %cst = arith.constant 0.000000e+00 : f32
    %8 = vector.broadcast %cst : f32 to vector<1x8xf32>
    %9 = arith.cmpf one, %7, %8 : vector<1x8xf32>
    %10 = vector.broadcast %9 : vector<1x8xi1> to vector<8x8xi1>
    %11 = arith.andi %5, %10 : vector<8x8xi1>
    %c0_2 = arith.constant 0 : index
    %c0_3 = arith.constant 0 : index
    %c0_4 = arith.constant 0 : index
    %c0_5 = arith.constant 0 : index
    %12 = vector.load %arg4[%c0_2, %c0_3, %c0_4, %c0_5] : memref<1x4x8x8xf32, #tpu.memory_space<vmem>>, vector<1x1x8x8xf32>
    %13 = vector.shape_cast %12 : vector<1x1x8x8xf32> to vector<8x8xf32>
    %c0_6 = arith.constant 0 : index
    %c0_7 = arith.constant 0 : index
    %c0_8 = arith.constant 0 : index
    %c0_9 = arith.constant 0 : index
    %14 = vector.load %arg5[%c0_6, %c0_7, %c0_8, %c0_9] : memref<1x4x8x8xf32, #tpu.memory_space<vmem>>, vector<1x1x8x8xf32>
    %15 = vector.shape_cast %14 : vector<1x1x8x8xf32> to vector<8x8xf32>
    %c0_10 = arith.constant 0 : index
    %c0_11 = arith.constant 0 : index
    %c0_12 = arith.constant 0 : index
    %c0_13 = arith.constant 0 : index
    %16 = vector.load %arg6[%c0_10, %c0_11, %c0_12, %c0_13] : memref<1x4x8x8xf32, #tpu.memory_space<vmem>>, vector<1x1x8x8xf32>
    %17 = vector.shape_cast %16 : vector<1x1x8x8xf32> to vector<8x8xf32>
    %cst_14 = arith.constant dense<0.000000e+00> : vector<8x8xf32>
    %18 = tpu.matmul %13, %15, %cst_14 {dimension_numbers = #tpu.dot_dimension_numbers<[1], [1], [0], [0], [0, 0, 1, 0], [], []>} : vector<8x8xf32>, vector<8x8xf32>, vector<8x8xf32> -> vector<8x8xf32>
    %cst_15 = arith.constant -1.000000e+06 : f32
    %19 = vector.broadcast %cst_15 : f32 to vector<8x8xf32>
    %20 = arith.select %11, %18, %19 : vector<8x8xi1>, vector<8x8xf32>
    %cst_16 = arith.constant dense<0xFF800000> : vector<8xf32>
    %21 = vector.multi_reduction <maximumf>, %20, %cst_16 [1] : vector<8x8xf32> to vector<8xf32>
    %22 = vector.shape_cast %21 : vector<8xf32> to vector<8x1xf32>
    %23 = vector.broadcast %22 : vector<8x1xf32> to vector<8x8xf32>
    %24 = arith.subf %20, %23 : vector<8x8xf32>
    %25 = math.exp %24 : vector<8x8xf32>
    %cst_17 = arith.constant dense<0.000000e+00> : vector<8xf32>
    %26 = vector.multi_reduction <add>, %25, %cst_17 [1] : vector<8x8xf32> to vector<8xf32>
    %27 = vector.shape_cast %26 : vector<8xf32> to vector<8x1xf32>
    %28 = vector.broadcast %27 : vector<8x1xf32> to vector<8x8xf32>
    %29 = arith.divf %25, %28 : vector<8x8xf32>
    %cst_18 = arith.constant dense<0.000000e+00> : vector<8x8xf32>
    %30 = tpu.matmul %29, %17, %cst_18 {dimension_numbers = #tpu.dot_dimension_numbers<[1], [0], [0], [1], [0, 0, 1, 1], [], []>} : vector<8x8xf32>, vector<8x8xf32>, vector<8x8xf32> -> vector<8x8xf32>
    %c0_19 = arith.constant 0 : index
    %c1 = arith.constant 1 : index
    %c0_20 = arith.constant 0 : index
    %c0_21 = arith.constant 0 : index
    %31 = vector.load %arg4[%c0_19, %c1, %c0_20, %c0_21] : memref<1x4x8x8xf32, #tpu.memory_space<vmem>>, vector<1x1x8x8xf32>
    %32 = vector.shape_cast %31 : vector<1x1x8x8xf32> to vector<8x8xf32>
    %c0_22 = arith.constant 0 : index
    %c1_23 = arith.constant 1 : index
    %c0_24 = arith.constant 0 : index
    %c0_25 = arith.constant 0 : index
    %33 = vector.load %arg5[%c0_22, %c1_23, %c0_24, %c0_25] : memref<1x4x8x8xf32, #tpu.memory_space<vmem>>, vector<1x1x8x8xf32>
    %34 = vector.shape_cast %33 : vector<1x1x8x8xf32> to vector<8x8xf32>
    %c0_26 = arith.constant 0 : index
    %c1_27 = arith.constant 1 : index
    %c0_28 = arith.constant 0 : index
    %c0_29 = arith.constant 0 : index
    %35 = vector.load %arg6[%c0_26, %c1_27, %c0_28, %c0_29] : memref<1x4x8x8xf32, #tpu.memory_space<vmem>>, vector<1x1x8x8xf32>
    %36 = vector.shape_cast %35 : vector<1x1x8x8xf32> to vector<8x8xf32>
    %cst_30 = arith.constant dense<0.000000e+00> : vector<8x8xf32>
    %37 = tpu.matmul %32, %34, %cst_30 {dimension_numbers = #tpu.dot_dimension_numbers<[1], [1], [0], [0], [0, 0, 1, 0], [], []>} : vector<8x8xf32>, vector<8x8xf32>, vector<8x8xf32> -> vector<8x8xf32>
    %cst_31 = arith.constant -1.000000e+06 : f32
    %38 = vector.broadcast %cst_31 : f32 to vector<8x8xf32>
    %39 = arith.select %11, %37, %38 : vector<8x8xi1>, vector<8x8xf32>
    %cst_32 = arith.constant dense<0xFF800000> : vector<8xf32>
    %40 = vector.multi_reduction <maximumf>, %39, %cst_32 [1] : vector<8x8xf32> to vector<8xf32>
    %41 = vector.shape_cast %40 : vector<8xf32> to vector<8x1xf32>
    %42 = vector.broadcast %41 : vector<8x1xf32> to vector<8x8xf32>
    %43 = arith.subf %39, %42 : vector<8x8xf32>
    %44 = math.exp %43 : vector<8x8xf32>
    %cst_33 = arith.constant dense<0.000000e+00> : vector<8xf32>
    %45 = vector.multi_reduction <add>, %44, %cst_33 [1] : vector<8x8xf32> to vector<8xf32>
    %46 = vector.shape_cast %45 : vector<8xf32> to vector<8x1xf32>
    %47 = vector.broadcast %46 : vector<8x1xf32> to vector<8x8xf32>
    %48 = arith.divf %44, %47 : vector<8x8xf32>
    %cst_34 = arith.constant dense<0.000000e+00> : vector<8x8xf32>
    %49 = tpu.matmul %48, %36, %cst_34 {dimension_numbers = #tpu.dot_dimension_numbers<[1], [0], [0], [1], [0, 0, 1, 1], [], []>} : vector<8x8xf32>, vector<8x8xf32>, vector<8x8xf32> -> vector<8x8xf32>
    %c0_35 = arith.constant 0 : index
    %c2 = arith.constant 2 : index
    %c0_36 = arith.constant 0 : index
    %c0_37 = arith.constant 0 : index
    %50 = vector.load %arg4[%c0_35, %c2, %c0_36, %c0_37] : memref<1x4x8x8xf32, #tpu.memory_space<vmem>>, vector<1x1x8x8xf32>
    %51 = vector.shape_cast %50 : vector<1x1x8x8xf32> to vector<8x8xf32>
    %c0_38 = arith.constant 0 : index
    %c2_39 = arith.constant 2 : index
    %c0_40 = arith.constant 0 : index
    %c0_41 = arith.constant 0 : index
    %52 = vector.load %arg5[%c0_38, %c2_39, %c0_40, %c0_41] : memref<1x4x8x8xf32, #tpu.memory_space<vmem>>, vector<1x1x8x8xf32>
    %53 = vector.shape_cast %52 : vector<1x1x8x8xf32> to vector<8x8xf32>
    %c0_42 = arith.constant 0 : index
    %c2_43 = arith.constant 2 : index
    %c0_44 = arith.constant 0 : index
    %c0_45 = arith.constant 0 : index
    %54 = vector.load %arg6[%c0_42, %c2_43, %c0_44, %c0_45] : memref<1x4x8x8xf32, #tpu.memory_space<vmem>>, vector<1x1x8x8xf32>
    %55 = vector.shape_cast %54 : vector<1x1x8x8xf32> to vector<8x8xf32>
    %cst_46 = arith.constant dense<0.000000e+00> : vector<8x8xf32>
    %56 = tpu.matmul %51, %53, %cst_46 {dimension_numbers = #tpu.dot_dimension_numbers<[1], [1], [0], [0], [0, 0, 1, 0], [], []>} : vector<8x8xf32>, vector<8x8xf32>, vector<8x8xf32> -> vector<8x8xf32>
    %cst_47 = arith.constant -1.000000e+06 : f32
    %57 = vector.broadcast %cst_47 : f32 to vector<8x8xf32>
    %58 = arith.select %11, %56, %57 : vector<8x8xi1>, vector<8x8xf32>
    %cst_48 = arith.constant dense<0xFF800000> : vector<8xf32>
    %59 = vector.multi_reduction <maximumf>, %58, %cst_48 [1] : vector<8x8xf32> to vector<8xf32>
    %60 = vector.shape_cast %59 : vector<8xf32> to vector<8x1xf32>
    %61 = vector.broadcast %60 : vector<8x1xf32> to vector<8x8xf32>
    %62 = arith.subf %58, %61 : vector<8x8xf32>
    %63 = math.exp %62 : vector<8x8xf32>
    %cst_49 = arith.constant dense<0.000000e+00> : vector<8xf32>
    %64 = vector.multi_reduction <add>, %63, %cst_49 [1] : vector<8x8xf32> to vector<8xf32>
    %65 = vector.shape_cast %64 : vector<8xf32> to vector<8x1xf32>
    %66 = vector.broadcast %65 : vector<8x1xf32> to vector<8x8xf32>
    %67 = arith.divf %63, %66 : vector<8x8xf32>
    %cst_50 = arith.constant dense<0.000000e+00> : vector<8x8xf32>
    %68 = tpu.matmul %67, %55, %cst_50 {dimension_numbers = #tpu.dot_dimension_numbers<[1], [0], [0], [1], [0, 0, 1, 1], [], []>} : vector<8x8xf32>, vector<8x8xf32>, vector<8x8xf32> -> vector<8x8xf32>
    %c0_51 = arith.constant 0 : index
    %c3 = arith.constant 3 : index
    %c0_52 = arith.constant 0 : index
    %c0_53 = arith.constant 0 : index
    %69 = vector.load %arg4[%c0_51, %c3, %c0_52, %c0_53] : memref<1x4x8x8xf32, #tpu.memory_space<vmem>>, vector<1x1x8x8xf32>
    %70 = vector.shape_cast %69 : vector<1x1x8x8xf32> to vector<8x8xf32>
    %c0_54 = arith.constant 0 : index
    %c3_55 = arith.constant 3 : index
    %c0_56 = arith.constant 0 : index
    %c0_57 = arith.constant 0 : index
    %71 = vector.load %arg5[%c0_54, %c3_55, %c0_56, %c0_57] : memref<1x4x8x8xf32, #tpu.memory_space<vmem>>, vector<1x1x8x8xf32>
    %72 = vector.shape_cast %71 : vector<1x1x8x8xf32> to vector<8x8xf32>
    %c0_58 = arith.constant 0 : index
    %c3_59 = arith.constant 3 : index
    %c0_60 = arith.constant 0 : index
    %c0_61 = arith.constant 0 : index
    %73 = vector.load %arg6[%c0_58, %c3_59, %c0_60, %c0_61] : memref<1x4x8x8xf32, #tpu.memory_space<vmem>>, vector<1x1x8x8xf32>
    %74 = vector.shape_cast %73 : vector<1x1x8x8xf32> to vector<8x8xf32>
    %cst_62 = arith.constant dense<0.000000e+00> : vector<8x8xf32>
    %75 = tpu.matmul %70, %72, %cst_62 {dimension_numbers = #tpu.dot_dimension_numbers<[1], [1], [0], [0], [0, 0, 1, 0], [], []>} : vector<8x8xf32>, vector<8x8xf32>, vector<8x8xf32> -> vector<8x8xf32>
    %cst_63 = arith.constant -1.000000e+06 : f32
    %76 = vector.broadcast %cst_63 : f32 to vector<8x8xf32>
    %77 = arith.select %11, %75, %76 : vector<8x8xi1>, vector<8x8xf32>
    %cst_64 = arith.constant dense<0xFF800000> : vector<8xf32>
    %78 = vector.multi_reduction <maximumf>, %77, %cst_64 [1] : vector<8x8xf32> to vector<8xf32>
    %79 = vector.shape_cast %78 : vector<8xf32> to vector<8x1xf32>
    %80 = vector.broadcast %79 : vector<8x1xf32> to vector<8x8xf32>
    %81 = arith.subf %77, %80 : vector<8x8xf32>
    %82 = math.exp %81 : vector<8x8xf32>
    %cst_65 = arith.constant dense<0.000000e+00> : vector<8xf32>
    %83 = vector.multi_reduction <add>, %82, %cst_65 [1] : vector<8x8xf32> to vector<8xf32>
    %84 = vector.shape_cast %83 : vector<8xf32> to vector<8x1xf32>
    %85 = vector.broadcast %84 : vector<8x1xf32> to vector<8x8xf32>
    %86 = arith.divf %82, %85 : vector<8x8xf32>
    %cst_66 = arith.constant dense<0.000000e+00> : vector<8x8xf32>
    %87 = tpu.matmul %86, %74, %cst_66 {dimension_numbers = #tpu.dot_dimension_numbers<[1], [0], [0], [1], [0, 0, 1, 1], [], []>} : vector<8x8xf32>, vector<8x8xf32>, vector<8x8xf32> -> vector<8x8xf32>
    %88 = tpu.concatenate %30, %49, %68, %87 in 1 : vector<8x8xf32>, vector<8x8xf32>, vector<8x8xf32>, vector<8x8xf32> -> vector<8x32xf32>
    %c0_67 = arith.constant 0 : index
    %c0_68 = arith.constant 0 : index
    %c0_69 = arith.constant 0 : index
    %89 = vector.load %arg10[%c0_67, %c0_68, %c0_69] : memref<1x8x32xf32, #tpu.memory_space<vmem>>, vector<1x8x32xf32>
    %90 = vector.shape_cast %89 : vector<1x8x32xf32> to vector<8x32xf32>
    %91 = vector.shape_cast %88 : vector<8x32xf32> to vector<1x8x32xf32>
    tpu.vector_store %arg10[%c0_67, %c0_68, %c0_69], %91 {strides = array<i32>} : memref<1x8x32xf32, #tpu.memory_space<vmem>>, vector<1x8x32xf32>,
    %c0_70 = arith.constant 0 : index
    %c0_71 = arith.constant 0 : index
    %c0_72 = arith.constant 0 : index
    %92 = vector.load %arg10[%c0_70, %c0_71, %c0_72] : memref<1x8x32xf32, #tpu.memory_space<vmem>>, vector<1x8x32xf32>
    %93 = vector.shape_cast %92 : vector<1x8x32xf32> to vector<8x32xf32>
    %c0_73 = arith.constant 0 : index
    %c0_74 = arith.constant 0 : index
    %94 = vector.load %arg7[%c0_73, %c0_74] : memref<32x32xf32, #tpu.memory_space<vmem>>, vector<32x32xf32>
    %cst_75 = arith.constant dense<0.000000e+00> : vector<8x32xf32>
    %95 = tpu.matmul %93, %94, %cst_75 {dimension_numbers = #tpu.dot_dimension_numbers<[1], [0], [0], [1], [0, 0, 1, 1], [], []>} : vector<8x32xf32>, vector<32x32xf32>, vector<8x32xf32> -> vector<8x32xf32>
    %c0_76 = arith.constant 0 : index
    %c0_77 = arith.constant 0 : index
    %96 = vector.load %arg8[%c0_76, %c0_77] : memref<1x32xf32, #tpu.memory_space<vmem>>, vector<1x32xf32>
    %97 = vector.broadcast %96 : vector<1x32xf32> to vector<8x32xf32>
    %98 = arith.addf %95, %97 : vector<8x32xf32>
    %c0_78 = arith.constant 0 : index
    %c0_79 = arith.constant 0 : index
    %c0_80 = arith.constant 0 : index
    %99 = vector.load %arg9[%c0_78, %c0_79, %c0_80] : memref<1x8x32xf32, #tpu.memory_space<vmem>>, vector<1x8x32xf32>
    %100 = vector.shape_cast %99 : vector<1x8x32xf32> to vector<8x32xf32>
    %101 = vector.shape_cast %98 : vector<8x32xf32> to vector<1x8x32xf32>
    tpu.vector_store %arg9[%c0_78, %c0_79, %c0_80], %101 {strides = array<i32>} : memref<1x8x32xf32, #tpu.memory_space<vmem>>, vector<1x8x32xf32>,
    return
  }
  func.func @transform_0(%arg0: i32, %arg1: i32, %arg2: i32) -> (i32, i32, i32) {
    %c0_i32 = arith.constant 0 : i32
    %c0_i32_0 = arith.constant 0 : i32
    %c0_i32_1 = arith.constant 0 : i32
    return %arg0, %c0_i32, %c0_i32_0 : i32, i32, i32
  }
  func.func @transform_1(%arg0: i32, %arg1: i32, %arg2: i32) -> (i32, i32, i32, i32) {
    %c0_i32 = arith.constant 0 : i32
    %c0_i32_0 = arith.constant 0 : i32
    return %arg0, %arg2, %arg1, %c0_i32 : i32, i32, i32, i32
  }
  func.func @transform_2(%arg0: i32, %arg1: i32, %arg2: i32) -> (i32, i32, i32, i32) {
    %c0_i32 = arith.constant 0 : i32
    %c0_i32_0 = arith.constant 0 : i32
    %c0_i32_1 = arith.constant 0 : i32
    return %arg0, %arg2, %c0_i32, %c0_i32_0 : i32, i32, i32, i32
  }
  func.func @transform_3(%arg0: i32, %arg1: i32, %arg2: i32) -> (i32, i32, i32, i32) {
    %c0_i32 = arith.constant 0 : i32
    %c0_i32_0 = arith.constant 0 : i32
    %c0_i32_1 = arith.constant 0 : i32
    return %arg0, %arg2, %c0_i32, %c0_i32_0 : i32, i32, i32, i32
  }
  func.func @transform_4(%arg0: i32, %arg1: i32, %arg2: i32) -> (i32, i32) {
    %c0_i32 = arith.constant 0 : i32
    %c0_i32_0 = arith.constant 0 : i32
    %c0_i32_1 = arith.constant 0 : i32
    return %c0_i32, %c0_i32_0 : i32, i32
  }
  func.func @transform_5(%arg0: i32, %arg1: i32, %arg2: i32) -> (i32, i32) {
    %c0_i32 = arith.constant 0 : i32
    %c0_i32_0 = arith.constant 0 : i32
    %c0_i32_1 = arith.constant 0 : i32
    return %c0_i32, %c0_i32_0 : i32, i32
  }
  func.func @transform_6(%arg0: i32, %arg1: i32, %arg2: i32) -> (i32, i32, i32) {
    %c0_i32 = arith.constant 0 : i32
    %c0_i32_0 = arith.constant 0 : i32
    return %arg0, %arg1, %c0_i32 : i32, i32, i32
  }
}

module attributes {stable_mosaic.version = 11 : i64} {
  func.func @_attn_kernel(%arg0: i32, %arg1: i32, %arg2: i32, %arg3: memref<1x1x8xf32, #tpu.memory_space<vmem>>, %arg4: memref<1x4x8x8xf32, #tpu.memory_space<vmem>>, %arg5: memref<1x4x8x8xf32, #tpu.memory_space<vmem>>, %arg6: memref<1x4x8x8xf32, #tpu.memory_space<vmem>>, %arg7: memref<32x32xf32, #tpu.memory_space<vmem>>, %arg8: memref<1x32xf32, #tpu.memory_space<vmem>>, %arg9: memref<1x8x32xf32, #tpu.memory_space<vmem>>, %arg10: memref<1x8x32xf32, #tpu.memory_space<vmem>>) attributes {dimension_semantics = [#tpu.dimension_semantics<parallel>, #tpu.dimension_semantics<parallel>, #tpu.dimension_semantics<arbitrary>], iteration_bounds = array<i64: 2, 1, 1>, scalar_prefetch = 0 : i64, scratch_operands = 1 : i64, tpu.core_type = #tpu.core_type<tc>, window_params = [{transform_indices = @transform_0, window_bounds = array<i64: 1, 1, 8>}, {transform_indices = @transform_1, window_bounds = array<i64: 1, 4, 8, 8>}, {transform_indices = @transform_2, window_bounds = array<i64: 1, 4, 8, 8>}, {transform_indices = @transform_3, window_bounds = array<i64: 1, 4, 8, 8>}, {pipeline_mode = #tpu.pipeline_mode<synchronous>, transform_indices = @transform_4, window_bounds = array<i64: 32, 32>}, {pipeline_mode = #tpu.pipeline_mode<synchronous>, transform_indices = @transform_5, window_bounds = array<i64: 1, 32>}, {transform_indices = @transform_6, window_bounds = array<i64: 1, 8, 32>}]} {
    %0 = tpu.iota {dimensions = array<i32: 0>} : vector<8x8xi32>
    %c8_i32 = arith.constant 8 : i32
    %1 = arith.muli %arg1, %c8_i32 : i32
    %2 = vector.broadcast %1 : i32 to vector<8x8xi32>
    %3 = arith.addi %0, %2 : vector<8x8xi32>
    %4 = tpu.iota {dimensions = array<i32: 1>} : vector<8x8xi32>
    %5 = arith.cmpi sle, %4, %3 : vector<8x8xi32>
    %c0 = arith.constant 0 : index
    %c0_0 = arith.constant 0 : index
    %c0_1 = arith.constant 0 : index
    %6 = vector.load %arg3[%c0, %c0_0, %c0_1] : memref<1x1x8xf32, #tpu.memory_space<vmem>>, vector<1x1x8xf32>
    %7 = vector.shape_cast %6 : vector<1x1x8xf32> to vector<1x8xf32>
    %cst = arith.constant 0.000000e+00 : f32
    %8 = vector.broadcast %cst : f32 to vector<1x8xf32>
    %9 = arith.cmpf one, %7, %8 : vector<1x8xf32>
    %10 = vector.broadcast %9 : vector<1x8xi1> to vector<8x8xi1>
    %11 = arith.andi %5, %10 : vector<8x8xi1>
    %c0_2 = arith.constant 0 : index
    %c0_3 = arith.constant 0 : index
    %c0_4 = arith.constant 0 : index
    %c0_5 = arith.constant 0 : index
    %12 = vector.load %arg4[%c0_2, %c0_3, %c0_4, %c0_5] : memref<1x4x8x8xf32, #tpu.memory_space<vmem>>, vector<1x1x8x8xf32>
    %13 = vector.shape_cast %12 : vector<1x1x8x8xf32> to vector<8x8xf32>
    %c0_6 = arith.constant 0 : index
    %c0_7 = arith.constant 0 : index
    %c0_8 = arith.constant 0 : index
    %c0_9 = arith.constant 0 : index
    %14 = vector.load %arg5[%c0_6, %c0_7, %c0_8, %c0_9] : memref<1x4x8x8xf32, #tpu.memory_space<vmem>>, vector<1x1x8x8xf32>
    %15 = vector.shape_cast %14 : vector<1x1x8x8xf32> to vector<8x8xf32>
    %c0_10 = arith.constant 0 : index
    %c0_11 = arith.constant 0 : index
    %c0_12 = arith.constant 0 : index
    %c0_13 = arith.constant 0 : index
    %16 = vector.load %arg6[%c0_10, %c0_11, %c0_12, %c0_13] : memref<1x4x8x8xf32, #tpu.memory_space<vmem>>, vector<1x1x8x8xf32>
    %17 = vector.shape_cast %16 : vector<1x1x8x8xf32> to vector<8x8xf32>
    %cst_14 = arith.constant dense<0.000000e+00> : vector<8x8xf32>
    %18 = tpu.matmul %13, %15, %cst_14 {dimension_numbers = #tpu.dot_dimension_numbers<[1], [1], [0], [0], [0, 0, 1, 0], [], []>} : vector<8x8xf32>, vector<8x8xf32>, vector<8x8xf32> -> vector<8x8xf32>
    %cst_15 = arith.constant -1.000000e+06 : f32
    %19 = vector.broadcast %cst_15 : f32 to vector<8x8xf32>
    %20 = arith.select %11, %18, %19 : vector<8x8xi1>, vector<8x8xf32>
    %cst_16 = arith.constant dense<0xFF800000> : vector<8xf32>
    %21 = vector.multi_reduction <maximumf>, %20, %cst_16 [1] : vector<8x8xf32> to vector<8xf32>
    %22 = vector.shape_cast %21 : vector<8xf32> to vector<8x1xf32>
    %23 = vector.broadcast %22 : vector<8x1xf32> to vector<8x8xf32>
    %24 = arith.subf %20, %23 : vector<8x8xf32>
    %25 = math.exp %24 : vector<8x8xf32>
    %cst_17 = arith.constant dense<0.000000e+00> : vector<8xf32>
    %26 = vector.multi_reduction <add>, %25, %cst_17 [1] : vector<8x8xf32> to vector<8xf32>
    %27 = vector.shape_cast %26 : vector<8xf32> to vector<8x1xf32>
    %28 = vector.broadcast %27 : vector<8x1xf32> to vector<8x8xf32>
    %29 = arith.divf %25, %28 : vector<8x8xf32>
    %cst_18 = arith.constant dense<0.000000e+00> : vector<8x8xf32>
    %30 = tpu.matmul %29, %17, %cst_18 {dimension_numbers = #tpu.dot_dimension_numbers<[1], [0], [0], [1], [0, 0, 1, 1], [], []>} : vector<8x8xf32>, vector<8x8xf32>, vector<8x8xf32> -> vector<8x8xf32>
    %c0_19 = arith.constant 0 : index
    %c1 = arith.constant 1 : index
    %c0_20 = arith.constant 0 : index
    %c0_21 = arith.constant 0 : index
    %31 = vector.load %arg4[%c0_19, %c1, %c0_20, %c0_21] : memref<1x4x8x8xf32, #tpu.memory_space<vmem>>, vector<1x1x8x8xf32>
    %32 = vector.shape_cast %31 : vector<1x1x8x8xf32> to vector<8x8xf32>
    %c0_22 = arith.constant 0 : index
    %c1_23 = arith.constant 1 : index
    %c0_24 = arith.constant 0 : index
    %c0_25 = arith.constant 0 : index
    %33 = vector.load %arg5[%c0_22, %c1_23, %c0_24, %c0_25] : memref<1x4x8x8xf32, #tpu.memory_space<vmem>>, vector<1x1x8x8xf32>
    %34 = vector.shape_cast %33 : vector<1x1x8x8xf32> to vector<8x8xf32>
    %c0_26 = arith.constant 0 : index
    %c1_27 = arith.constant 1 : index
    %c0_28 = arith.constant 0 : index
    %c0_29 = arith.constant 0 : index
    %35 = vector.load %arg6[%c0_26, %c1_27, %c0_28, %c0_29] : memref<1x4x8x8xf32, #tpu.memory_space<vmem>>, vector<1x1x8x8xf32>
    %36 = vector.shape_cast %35 : vector<1x1x8x8xf32> to vector<8x8xf32>
    %cst_30 = arith.constant dense<0.000000e+00> : vector<8x8xf32>
    %37 = tpu.matmul %32, %34, %cst_30 {dimension_numbers = #tpu.dot_dimension_numbers<[1], [1], [0], [0], [0, 0, 1, 0], [], []>} : vector<8x8xf32>, vector<8x8xf32>, vector<8x8xf32> -> vector<8x8xf32>
    %cst_31 = arith.constant -1.000000e+06 : f32
    %38 = vector.broadcast %cst_31 : f32 to vector<8x8xf32>
    %39 = arith.select %11, %37, %38 : vector<8x8xi1>, vector<8x8xf32>
    %cst_32 = arith.constant dense<0xFF800000> : vector<8xf32>
    %40 = vector.multi_reduction <maximumf>, %39, %cst_32 [1] : vector<8x8xf32> to vector<8xf32>
    %41 = vector.shape_cast %40 : vector<8xf32> to vector<8x1xf32>
    %42 = vector.broadcast %41 : vector<8x1xf32> to vector<8x8xf32>
    %43 = arith.subf %39, %42 : vector<8x8xf32>
    %44 = math.exp %43 : vector<8x8xf32>
    %cst_33 = arith.constant dense<0.000000e+00> : vector<8xf32>
    %45 = vector.multi_reduction <add>, %44, %cst_33 [1] : vector<8x8xf32> to vector<8xf32>
    %46 = vector.shape_cast %45 : vector<8xf32> to vector<8x1xf32>
    %47 = vector.broadcast %46 : vector<8x1xf32> to vector<8x8xf32>
    %48 = arith.divf %44, %47 : vector<8x8xf32>
    %cst_34 = arith.constant dense<0.000000e+00> : vector<8x8xf32>
    %49 = tpu.matmul %48, %36, %cst_34 {dimension_numbers = #tpu.dot_dimension_numbers<[1], [0], [0], [1], [0, 0, 1, 1], [], []>} : vector<8x8xf32>, vector<8x8xf32>, vector<8x8xf32> -> vector<8x8xf32>
    %c0_35 = arith.constant 0 : index
    %c2 = arith.constant 2 : index
    %c0_36 = arith.constant 0 : index
    %c0_37 = arith.constant 0 : index
    %50 = vector.load %arg4[%c0_35, %c2, %c0_36, %c0_37] : memref<1x4x8x8xf32, #tpu.memory_space<vmem>>, vector<1x1x8x8xf32>
    %51 = vector.shape_cast %50 : vector<1x1x8x8xf32> to vector<8x8xf32>
    %c0_38 = arith.constant 0 : index
    %c2_39 = arith.constant 2 : index
    %c0_40 = arith.constant 0 : index
    %c0_41 = arith.constant 0 : index
    %52 = vector.load %arg5[%c0_38, %c2_39, %c0_40, %c0_41] : memref<1x4x8x8xf32, #tpu.memory_space<vmem>>, vector<1x1x8x8xf32>
    %53 = vector.shape_cast %52 : vector<1x1x8x8xf32> to vector<8x8xf32>
    %c0_42 = arith.constant 0 : index
    %c2_43 = arith.constant 2 : index
    %c0_44 = arith.constant 0 : index
    %c0_45 = arith.constant 0 : index
    %54 = vector.load %arg6[%c0_42, %c2_43, %c0_44, %c0_45] : memref<1x4x8x8xf32, #tpu.memory_space<vmem>>, vector<1x1x8x8xf32>
    %55 = vector.shape_cast %54 : vector<1x1x8x8xf32> to vector<8x8xf32>
    %cst_46 = arith.constant dense<0.000000e+00> : vector<8x8xf32>
    %56 = tpu.matmul %51, %53, %cst_46 {dimension_numbers = #tpu.dot_dimension_numbers<[1], [1], [0], [0], [0, 0, 1, 0], [], []>} : vector<8x8xf32>, vector<8x8xf32>, vector<8x8xf32> -> vector<8x8xf32>
    %cst_47 = arith.constant -1.000000e+06 : f32
    %57 = vector.broadcast %cst_47 : f32 to vector<8x8xf32>
    %58 = arith.select %11, %56, %57 : vector<8x8xi1>, vector<8x8xf32>
    %cst_48 = arith.constant dense<0xFF800000> : vector<8xf32>
    %59 = vector.multi_reduction <maximumf>, %58, %cst_48 [1] : vector<8x8xf32> to vector<8xf32>
    %60 = vector.shape_cast %59 : vector<8xf32> to vector<8x1xf32>
    %61 = vector.broadcast %60 : vector<8x1xf32> to vector<8x8xf32>
    %62 = arith.subf %58, %61 : vector<8x8xf32>
    %63 = math.exp %62 : vector<8x8xf32>
    %cst_49 = arith.constant dense<0.000000e+00> : vector<8xf32>
    %64 = vector.multi_reduction <add>, %63, %cst_49 [1] : vector<8x8xf32> to vector<8xf32>
    %65 = vector.shape_cast %64 : vector<8xf32> to vector<8x1xf32>
    %66 = vector.broadcast %65 : vector<8x1xf32> to vector<8x8xf32>
    %67 = arith.divf %63, %66 : vector<8x8xf32>
    %cst_50 = arith.constant dense<0.000000e+00> : vector<8x8xf32>
    %68 = tpu.matmul %67, %55, %cst_50 {dimension_numbers = #tpu.dot_dimension_numbers<[1], [0], [0], [1], [0, 0, 1, 1], [], []>} : vector<8x8xf32>, vector<8x8xf32>, vector<8x8xf32> -> vector<8x8xf32>
    %c0_51 = arith.constant 0 : index
    %c3 = arith.constant 3 : index
    %c0_52 = arith.constant 0 : index
    %c0_53 = arith.constant 0 : index
    %69 = vector.load %arg4[%c0_51, %c3, %c0_52, %c0_53] : memref<1x4x8x8xf32, #tpu.memory_space<vmem>>, vector<1x1x8x8xf32>
    %70 = vector.shape_cast %69 : vector<1x1x8x8xf32> to vector<8x8xf32>
    %c0_54 = arith.constant 0 : index
    %c3_55 = arith.constant 3 : index
    %c0_56 = arith.constant 0 : index
    %c0_57 = arith.constant 0 : index
    %71 = vector.load %arg5[%c0_54, %c3_55, %c0_56, %c0_57] : memref<1x4x8x8xf32, #tpu.memory_space<vmem>>, vector<1x1x8x8xf32>
    %72 = vector.shape_cast %71 : vector<1x1x8x8xf32> to vector<8x8xf32>
    %c0_58 = arith.constant 0 : index
    %c3_59 = arith.constant 3 : index
    %c0_60 = arith.constant 0 : index
    %c0_61 = arith.constant 0 : index
    %73 = vector.load %arg6[%c0_58, %c3_59, %c0_60, %c0_61] : memref<1x4x8x8xf32, #tpu.memory_space<vmem>>, vector<1x1x8x8xf32>
    %74 = vector.shape_cast %73 : vector<1x1x8x8xf32> to vector<8x8xf32>
    %cst_62 = arith.constant dense<0.000000e+00> : vector<8x8xf32>
    %75 = tpu.matmul %70, %72, %cst_62 {dimension_numbers = #tpu.dot_dimension_numbers<[1], [1], [0], [0], [0, 0, 1, 0], [], []>} : vector<8x8xf32>, vector<8x8xf32>, vector<8x8xf32> -> vector<8x8xf32>
    %cst_63 = arith.constant -1.000000e+06 : f32
    %76 = vector.broadcast %cst_63 : f32 to vector<8x8xf32>
    %77 = arith.select %11, %75, %76 : vector<8x8xi1>, vector<8x8xf32>
    %cst_64 = arith.constant dense<0xFF800000> : vector<8xf32>
    %78 = vector.multi_reduction <maximumf>, %77, %cst_64 [1] : vector<8x8xf32> to vector<8xf32>
    %79 = vector.shape_cast %78 : vector<8xf32> to vector<8x1xf32>
    %80 = vector.broadcast %79 : vector<8x1xf32> to vector<8x8xf32>
    %81 = arith.subf %77, %80 : vector<8x8xf32>
    %82 = math.exp %81 : vector<8x8xf32>
    %cst_65 = arith.constant dense<0.000000e+00> : vector<8xf32>
    %83 = vector.multi_reduction <add>, %82, %cst_65 [1] : vector<8x8xf32> to vector<8xf32>
    %84 = vector.shape_cast %83 : vector<8xf32> to vector<8x1xf32>
    %85 = vector.broadcast %84 : vector<8x1xf32> to vector<8x8xf32>
    %86 = arith.divf %82, %85 : vector<8x8xf32>
    %cst_66 = arith.constant dense<0.000000e+00> : vector<8x8xf32>
    %87 = tpu.matmul %86, %74, %cst_66 {dimension_numbers = #tpu.dot_dimension_numbers<[1], [0], [0], [1], [0, 0, 1, 1], [], []>} : vector<8x8xf32>, vector<8x8xf32>, vector<8x8xf32> -> vector<8x8xf32>
    %88 = tpu.concatenate %30, %49, %68, %87 in 1 : vector<8x8xf32>, vector<8x8xf32>, vector<8x8xf32>, vector<8x8xf32> -> vector<8x32xf32>
    %c0_67 = arith.constant 0 : index
    %c0_68 = arith.constant 0 : index
    %c0_69 = arith.constant 0 : index
    %89 = vector.load %arg10[%c0_67, %c0_68, %c0_69] : memref<1x8x32xf32, #tpu.memory_space<vmem>>, vector<1x8x32xf32>
    %90 = vector.shape_cast %89 : vector<1x8x32xf32> to vector<8x32xf32>
    %91 = vector.shape_cast %88 : vector<8x32xf32> to vector<1x8x32xf32>
    tpu.vector_store %arg10[%c0_67, %c0_68, %c0_69], %91 {strides = array<i32>} : memref<1x8x32xf32, #tpu.memory_space<vmem>>, vector<1x8x32xf32>,
    %c0_70 = arith.constant 0 : index
    %c0_71 = arith.constant 0 : index
    %c0_72 = arith.constant 0 : index
    %92 = vector.load %arg10[%c0_70, %c0_71, %c0_72] : memref<1x8x32xf32, #tpu.memory_space<vmem>>, vector<1x8x32xf32>
    %93 = vector.shape_cast %92 : vector<1x8x32xf32> to vector<8x32xf32>
    %c0_73 = arith.constant 0 : index
    %c0_74 = arith.constant 0 : index
    %94 = vector.load %arg7[%c0_73, %c0_74] : memref<32x32xf32, #tpu.memory_space<vmem>>, vector<32x32xf32>
    %cst_75 = arith.constant dense<0.000000e+00> : vector<8x32xf32>
    %95 = tpu.matmul %93, %94, %cst_75 {dimension_numbers = #tpu.dot_dimension_numbers<[1], [0], [0], [1], [0, 0, 1, 1], [], []>} : vector<8x32xf32>, vector<32x32xf32>, vector<8x32xf32> -> vector<8x32xf32>
    %c0_76 = arith.constant 0 : index
    %c0_77 = arith.constant 0 : index
    %96 = vector.load %arg8[%c0_76, %c0_77] : memref<1x32xf32, #tpu.memory_space<vmem>>, vector<1x32xf32>
    %97 = vector.broadcast %96 : vector<1x32xf32> to vector<8x32xf32>
    %98 = arith.addf %95, %97 : vector<8x32xf32>
    %c0_78 = arith.constant 0 : index
    %c0_79 = arith.constant 0 : index
    %c0_80 = arith.constant 0 : index
    %99 = vector.load %arg9[%c0_78, %c0_79, %c0_80] : memref<1x8x32xf32, #tpu.memory_space<vmem>>, vector<1x8x32xf32>
    %100 = vector.shape_cast %99 : vector<1x8x32xf32> to vector<8x32xf32>
    %101 = vector.shape_cast %98 : vector<8x32xf32> to vector<1x8x32xf32>
    tpu.vector_store %arg9[%c0_78, %c0_79, %c0_80], %101 {strides = array<i32>} : memref<1x8x32xf32, #tpu.memory_space<vmem>>, vector<1x8x32xf32>,
    return
  }
  func.func @transform_0(%arg0: i32, %arg1: i32, %arg2: i32) -> (i32, i32, i32) {
    %c0_i32 = arith.constant 0 : i32
    %c0_i32_0 = arith.constant 0 : i32
    %c0_i32_1 = arith.constant 0 : i32
    return %arg0, %c0_i32, %c0_i32_0 : i32, i32, i32
  }
  func.func @transform_1(%arg0: i32, %arg1: i32, %arg2: i32) -> (i32, i32, i32, i32) {
    %c0_i32 = arith.constant 0 : i32
    %c0_i32_0 = arith.constant 0 : i32
    return %arg0, %arg2, %arg1, %c0_i32 : i32, i32, i32, i32
  }
  func.func @transform_2(%arg0: i32, %arg1: i32, %arg2: i32) -> (i32, i32, i32, i32) {
    %c0_i32 = arith.constant 0 : i32
    %c0_i32_0 = arith.constant 0 : i32
    %c0_i32_1 = arith.constant 0 : i32
    return %arg0, %arg2, %c0_i32, %c0_i32_0 : i32, i32, i32, i32
  }
  func.func @transform_3(%arg0: i32, %arg1: i32, %arg2: i32) -> (i32, i32, i32, i32) {
    %c0_i32 = arith.constant 0 : i32
    %c0_i32_0 = arith.constant 0 : i32
    %c0_i32_1 = arith.constant 0 : i32
    return %arg0, %arg2, %c0_i32, %c0_i32_0 : i32, i32, i32, i32
  }
  func.func @transform_4(%arg0: i32, %arg1: i32, %arg2: i32) -> (i32, i32) {
    %c0_i32 = arith.constant 0 : i32
    %c0_i32_0 = arith.constant 0 : i32
    %c0_i32_1 = arith.constant 0 : i32
    return %c0_i32, %c0_i32_0 : i32, i32
  }
  func.func @transform_5(%arg0: i32, %arg1: i32, %arg2: i32) -> (i32, i32) {
    %c0_i32 = arith.constant 0 : i32
    %c0_i32_0 = arith.constant 0 : i32
    %c0_i32_1 = arith.constant 0 : i32
    return %c0_i32, %c0_i32_0 : i32, i32
  }
  func.func @transform_6(%arg0: i32, %arg1: i32, %arg2: i32) -> (i32, i32, i32) {
    %c0_i32 = arith.constant 0 : i32
    %c0_i32_0 = arith.constant 0 : i32
    return %arg0, %arg1, %c0_i32 : i32, i32, i32
  }
}

</mosaic_0001>

<llo_original>
// kernel: tpu_custom_call.1
$region0: #{tpu_custom_call.1}
  #allocation0 [shape = 'u32[]', space=smem, size = 0x4, offset = 0x4, fixed_abs, tag = 'smem constant byte address 0x4 - core index']
  #allocation1 [shape = 'u32[72,128]{1,0:T(1,128)}', space=vmem, size = 0x9000, scoped, tag = 'internal scratch']
  #allocation2 [shape = 'f32[1,8,32]{2,1,0:T(8,128)}', space=vmem, size = 0x1000, scoped, tag = 'scratch operand']
  %s0 = inlined_call_operand.hbm [shape: f32[2,1,8], index: 0, kind: input, shape index: {}]
  %s1 = inlined_call_operand.hbm [shape: f32[2,4,8,8], index: 1, kind: input, shape index: {}]
  %s2 = inlined_call_operand.hbm [shape: f32[2,4,8,8], index: 2, kind: input, shape index: {}]
  %s3 = inlined_call_operand.hbm [shape: f32[2,4,8,8], index: 3, kind: input, shape index: {}]
  %s4 = inlined_call_operand.hbm [shape: f32[32,32], index: 4, kind: input, shape index: {}]
  %s5 = inlined_call_operand.vmem [shape: f32[1,32], index: 5, kind: input, shape index: {}]
  %s6 = inlined_call_operand.hbm [shape: f32[2,8,32], index: 6, kind: output, shape index: {}]
  %s7 = sld [smem:[#allocation0]]
  $region77: #{tpu_custom_call.1} parent=0
    _
  %s9 = ssub.s32 1, %s7
  %s10 = scalar_select 0, %s9, %s7
  $region1: #{tpu_custom_call.1} parent=0
    #allocation3 [shape = 'u8[1024]{0}', space=vmem, size = 0x400, scoped, tag = 'input window, operand 0']
    #allocation4 [shape = 's32[2]{0}', space=sflag, size = 0x8, scoped, tag = 'scoped memory for tpu_custom_call.1']
    #allocation5 [shape = 's32[2]{0}', space=sflag, size = 0x8, scoped, tag = 'scoped memory for tpu_custom_call.1']
    #allocation6 [shape = 'u8[32768]{0}', space=vmem, size = 0x8000, scoped, tag = 'input window, operand 1']
    #allocation7 [shape = 's32[2]{0}', space=sflag, size = 0x8, scoped, tag = 'scoped memory for tpu_custom_call.1']
    #allocation8 [shape = 'u8[32768]{0}', space=vmem, size = 0x8000, scoped, tag = 'input window, operand 2']
    #allocation9 [shape = 'u8[32768]{0}', space=vmem, size = 0x8000, scoped, tag = 'input window, operand 3']
    #allocation10 [shape = 's32[2]{0}', space=sflag, size = 0x8, scoped, tag = 'scoped memory for tpu_custom_call.1']
    #allocation11 [shape = 'u8[16384]{0}', space=vmem, size = 0x4000, scoped, tag = 'input window, operand 4, single buffered']
    #allocation12 [shape = 'u8[8192]{0}', space=vmem, size = 0x2000, scoped, tag = 'output window, operand 0']
    %11 = vsyncpa [#allocation4], 0
    %s12 = scalar_lea.sflag [#allocation4], 1
    %13 = vsyncpa %s12, 0
    %14 = vsyncpa [#allocation7], 0
    %s15 = scalar_lea.sflag [#allocation7], 1
    %16 = vsyncpa %s15, 0
    %17 = vsyncpa [#allocation10], 0
    %s18 = scalar_lea.sflag [#allocation10], 1
    %19 = vsyncpa %s18, 0
    %20 = vsyncpa [#allocation5], 0
    %s21 = scalar_lea.sflag [#allocation5], 1
    %22 = vsyncpa %s21, 0
    loop: start=0, step=1, limit=4
    $region2: #{tpu_custom_call.1} parent=1 // loop_pre_header
      _
    $region3: #{tpu_custom_call.1} parent=1 // loop_header
      %s24 = sphi 0, %s28
      %p25 = scmp.ge.s32.totalorder %s24, 4
      %s31 = sphi 0, %s50
      %s32 = sphi 0, %s46
      %s33 = sphi 0, %s42
      %s34 = sphi 0, %s31
      %s35 = sphi 0, %s32
      %s36 = sphi 0, %s33
      %s37 = sphi 0, %s34
      %s38 = sphi 0, %s35
      %s39 = sphi 0, %s36
      %s53 = sphi 0, %s55
      %s56 = sphi 0, %s53
      %s57 = sphi 0, %s56
      %s73 = sphi 0, %s57
      %s83 = sphi 0, %s85
      %s86 = sphi 0, %s83
      %s87 = sphi 0, %s86
      %s103 = sphi 0, %s87
      %s111 = sphi 0, %s113
      %s114 = sphi 0, %s111
      %s115 = sphi 0, %s114
      %s131 = sphi 0, %s115
      %s139 = sphi 0, %s141
      %s142 = sphi 0, %s139
      %s143 = sphi 0, %s142
      %s159 = sphi 0, %s143
      %s163 = sphi 0, %s163
      %s165 = sphi 0, %s163
      %s166 = sphi 0, %s165
      %s180 = sphi 0, %s166
      %s184 = sphi 0, %s184
      %s186 = sphi 0, %s184
      %s187 = sphi 0, %s186
      %s201 = sphi 0, %s187
      %s209 = sphi 0, %s211
      %s212 = sphi 0, %s209
      %s213 = sphi 0, %s212
      %s229 = sphi 0, %s213
    $region4: #{tpu_custom_call.1} parent=1 // loop_header_branch
      %27 = sbr.rel (%p25) target = $region8
    $region5: #{tpu_custom_call.1} parent=1 // loop_body
      %s29 = ssub.s32 %s24, 1
      %s30 = ssub.s32 %s24, 2
      %s40 = sadd.s32 1, %s33
      %p41 = scmp.ge.s32.totalorder %s40, 1
      %s42 = scalar_select %p41, 0, %s40
      %s43 = sadd.s32 1, %s32
      %s44 = scalar_select %p41, %s43, %s32
      %p45 = scmp.ge.s32.totalorder %s44, 1
      %s46 = scalar_select %p45, 0, %s44
      %s47 = sadd.s32 1, %s31
      %s48 = scalar_select %p45, %s47, %s31
      %p49 = scmp.ge.s32.totalorder %s48, 2
      %s50 = scalar_select %p49, 0, %s48
      %s51 = ssub.s32 %s31, %s50
      %p52 = scmp.eq.s32.totalorder %s51, 0
      %s54 = sadd.s32 %s53, 1
      %s55 = scalar_select %p52, %s53, %s54
      %p58 = pneg %p52
      %p59 = scmp.eq.s32.totalorder %s24, 1
      %p60 = por %p58, %p59
      %p61 = scmp.ne.s32.totalorder %s53, %s56
      %p62 = scmp.eq.s32.totalorder %s24, 0
      %p63 = por %p61, %p62
      %p64 = scmp.ne.s32.totalorder %s53, %s56
      %p65 = scmp.eq.s32.totalorder %s29, 1
      %p66 = por %p64, %p65
      %p67 = scmp.ne.s32.totalorder %s56, %s57
      %p68 = scmp.eq.s32.totalorder %s29, 0
      %p69 = por %p67, %p68
      %p70 = scmp.ne.s32.totalorder %s56, %s57
      %p71 = scmp.eq.s32.totalorder %s30, 1
      %p72 = por %p70, %p71
      %p74 = scmp.ne.s32.totalorder %s57, %s73
      %p75 = scmp.eq.s32.totalorder %s30, 0
      %p76 = por %p74, %p75
      %s77 = ssub.s32 %s31, %s50
      %s78 = ssub.s32 %s33, %s42
      %s79 = sor.u32 %s77, %s78
      %s80 = ssub.s32 %s32, %s46
      %s81 = sor.u32 %s79, %s80
      %p82 = scmp.eq.s32.totalorder %s81, 0
      %s84 = sadd.s32 %s83, 1
      %s85 = scalar_select %p82, %s83, %s84
      %p88 = pneg %p82
      %p89 = scmp.eq.s32.totalorder %s24, 1
      %p90 = por %p88, %p89
      %p91 = scmp.ne.s32.totalorder %s83, %s86
      %p92 = scmp.eq.s32.totalorder %s24, 0
      %p93 = por %p91, %p92
      %p94 = scmp.ne.s32.totalorder %s83, %s86
      %p95 = scmp.eq.s32.totalorder %s29, 1
      %p96 = por %p94, %p95
      %p97 = scmp.ne.s32.totalorder %s86, %s87
      %p98 = scmp.eq.s32.totalorder %s29, 0
      %p99 = por %p97, %p98
      %p100 = scmp.ne.s32.totalorder %s86, %s87
      %p101 = scmp.eq.s32.totalorder %s30, 1
      %p102 = por %p100, %p101
      %p104 = scmp.ne.s32.totalorder %s87, %s103
      %p105 = scmp.eq.s32.totalorder %s30, 0
      %p106 = por %p104, %p105
      %s107 = ssub.s32 %s31, %s50
      %s108 = ssub.s32 %s33, %s42
      %s109 = sor.u32 %s107, %s108
      %p110 = scmp.eq.s32.totalorder %s109, 0
      %s112 = sadd.s32 %s111, 1
      %s113 = scalar_select %p110, %s111, %s112
      %p116 = pneg %p110
      %p117 = scmp.eq.s32.totalorder %s24, 1
      %p118 = por %p116, %p117
      %p119 = scmp.ne.s32.totalorder %s111, %s114
      %p120 = scmp.eq.s32.totalorder %s24, 0
      %p121 = por %p119, %p120
      %p122 = scmp.ne.s32.totalorder %s111, %s114
      %p123 = scmp.eq.s32.totalorder %s29, 1
      %p124 = por %p122, %p123
      %p125 = scmp.ne.s32.totalorder %s114, %s115
      %p126 = scmp.eq.s32.totalorder %s29, 0
      %p127 = por %p125, %p126
      %p128 = scmp.ne.s32.totalorder %s114, %s115
      %p129 = scmp.eq.s32.totalorder %s30, 1
      %p130 = por %p128, %p129
      %p132 = scmp.ne.s32.totalorder %s115, %s131
      %p133 = scmp.eq.s32.totalorder %s30, 0
      %p134 = por %p132, %p133
      %s135 = ssub.s32 %s31, %s50
      %s136 = ssub.s32 %s33, %s42
      %s137 = sor.u32 %s135, %s136
      %p138 = scmp.eq.s32.totalorder %s137, 0
      %s140 = sadd.s32 %s139, 1
      %s141 = scalar_select %p138, %s139, %s140
      %p144 = pneg %p138
      %p145 = scmp.eq.s32.totalorder %s24, 1
      %p146 = por %p144, %p145
      %p147 = scmp.ne.s32.totalorder %s139, %s142
      %p148 = scmp.eq.s32.totalorder %s24, 0
      %p149 = por %p147, %p148
      %p150 = scmp.ne.s32.totalorder %s139, %s142
      %p151 = scmp.eq.s32.totalorder %s29, 1
      %p152 = por %p150, %p151
      %p153 = scmp.ne.s32.totalorder %s142, %s143
      %p154 = scmp.eq.s32.totalorder %s29, 0
      %p155 = por %p153, %p154
      %p156 = scmp.ne.s32.totalorder %s142, %s143
      %p157 = scmp.eq.s32.totalorder %s30, 1
      %p158 = por %p156, %p157
      %p160 = scmp.ne.s32.totalorder %s143, %s159
      %p161 = scmp.eq.s32.totalorder %s30, 0
      %p162 = por %p160, %p161
      %s164 = sadd.s32 %s163, 1
      %p167 = scmp.eq.s32.totalorder %s24, 1
      %p168 = scmp.ne.s32.totalorder %s163, %s165
      %p169 = scmp.eq.s32.totalorder %s24, 0
      %p170 = por %p168, %p169
      %p171 = scmp.ne.s32.totalorder %s163, %s165
      %p172 = scmp.eq.s32.totalorder %s29, 1
      %p173 = por %p171, %p172
      %p174 = scmp.ne.s32.totalorder %s165, %s166
      %p175 = scmp.eq.s32.totalorder %s29, 0
      %p176 = por %p174, %p175
      %p177 = scmp.ne.s32.totalorder %s165, %s166
      %p178 = scmp.eq.s32.totalorder %s30, 1
      %p179 = por %p177, %p178
      %p181 = scmp.ne.s32.totalorder %s166, %s180
      %p182 = scmp.eq.s32.totalorder %s30, 0
      %p183 = por %p181, %p182
      %s185 = sadd.s32 %s184, 1
      %p188 = scmp.eq.s32.totalorder %s24, 1
      %p189 = scmp.ne.s32.totalorder %s184, %s186
      %p190 = scmp.eq.s32.totalorder %s24, 0
      %p191 = por %p189, %p190
      %p192 = scmp.ne.s32.totalorder %s184, %s186
      %p193 = scmp.eq.s32.totalorder %s29, 1
      %p194 = por %p192, %p193
      %p195 = scmp.ne.s32.totalorder %s186, %s187
      %p196 = scmp.eq.s32.totalorder %s29, 0
      %p197 = por %p195, %p196
      %p198 = scmp.ne.s32.totalorder %s186, %s187
      %p199 = scmp.eq.s32.totalorder %s30, 1
      %p200 = por %p198, %p199
      %p202 = scmp.ne.s32.totalorder %s187, %s201
      %p203 = scmp.eq.s32.totalorder %s30, 0
      %p204 = por %p202, %p203
      %s205 = ssub.s32 %s31, %s50
      %s206 = ssub.s32 %s32, %s46
      %s207 = sor.u32 %s205, %s206
      %p208 = scmp.eq.s32.totalorder %s207, 0
      %s210 = sadd.s32 %s209, 1
      %s211 = scalar_select %p208, %s209, %s210
      %p214 = pneg %p208
      %p215 = scmp.eq.s32.totalorder %s24, 1
      %p216 = por %p214, %p215
      %p217 = scmp.ne.s32.totalorder %s209, %s212
      %p218 = scmp.eq.s32.totalorder %s24, 0
      %p219 = por %p217, %p218
      %p220 = scmp.ne.s32.totalorder %s209, %s212
      %p221 = scmp.eq.s32.totalorder %s29, 1
      %p222 = por %p220, %p221
      %p223 = scmp.ne.s32.totalorder %s212, %s213
      %p224 = scmp.eq.s32.totalorder %s29, 0
      %p225 = por %p223, %p224
      %p226 = scmp.ne.s32.totalorder %s212, %s213
      %p227 = scmp.eq.s32.totalorder %s30, 1
      %p228 = por %p226, %p227
      %p230 = scmp.ne.s32.totalorder %s213, %s229
      %p231 = scmp.eq.s32.totalorder %s30, 0
      %p232 = por %p230, %p231
      %p233 = scmp.le.s32.totalorder 1, %s24
      %p234 = scmp.lt.s32.totalorder %s24, 3
      %p235 = pnand %p233, %p234
      %p236 = pneg %p235
      // Predicated region
      $region9: #{tpu_custom_call.1} parent=5 // pred_check
        _
      $region10: #{tpu_custom_call.1} parent=5 // pred_check_branch
        %238 = sbr.rel (%p235) target = $region12
      $region11: #{tpu_custom_call.1} parent=5 // pred_region
        %s239 = ssub.s32 %s24, 1
        // Predicated region
        $region13: #{tpu_custom_call.1} parent=11 // pred_check
          %p240 = pneg %p176
        $region14: #{tpu_custom_call.1} parent=11 // pred_check_branch
          %242 = sbr.rel (%p240) target = $region16
        $region15: #{tpu_custom_call.1} parent=11 // pred_region
          %244 = vsyncadd [#allocation10], 0
          %s245 = sshll.u32 %s4, 4
          %s246 = int_to_ptr.hbm [resolvable:$true] %s245
          %s247 = sshll.u32 [#allocation11], 4
          %s248 = int_to_ptr.vmem [resolvable:$true] %s247
          %253 = dma.hbm_to_vmem [thread:$0]  %s246, 512, %s248, [#allocation10], 128, 128, 8
        $region16: #{tpu_custom_call.1} parent=11 // pred_fallthru
          _
        // Predicated region
        $region17: #{tpu_custom_call.1} parent=11 // pred_check
          %p254 = pneg %p197
        $region18: #{tpu_custom_call.1} parent=11 // pred_check_branch
          %256 = sbr.rel (%p254) target = $region20
        $region19: #{tpu_custom_call.1} parent=11 // pred_region
          _
        $region20: #{tpu_custom_call.1} parent=11 // pred_fallthru
          _
      $region12: #{tpu_custom_call.1} parent=5 // pred_fallthru
        _
      %p257 = scmp.lt.s32.totalorder %s24, 2
      // Predicated region
      $region21: #{tpu_custom_call.1} parent=5 // pred_check
        %p258 = pneg %p257
      $region22: #{tpu_custom_call.1} parent=5 // pred_check_branch
        %260 = sbr.rel (%p258) target = $region24
      $region23: #{tpu_custom_call.1} parent=5 // pred_region
        // Predicated region
        $region25: #{tpu_custom_call.1} parent=23 // pred_check
          %p261 = pneg %p63
        $region26: #{tpu_custom_call.1} parent=23 // pred_check_branch
          %263 = sbr.rel (%p261) target = $region28
        $region27: #{tpu_custom_call.1} parent=23 // pred_region
          %s264 = sand.u32 %s53, 1
          %s265 = scalar_lea.sflag [#allocation4], %s264
          %s266 = sand.u32 %s53, 1
          %s267 = scalar_lea.vmem [#allocation3], %s266
          %269 = vsyncadd %s265, 0
          %s270 = scalar_lea.hbm %s0, %s31
          %s272 = sshll.u32 %s270, 4
          %s273 = int_to_ptr.hbm [resolvable:$true] %s272
          %s274 = sshll.u32 %s267, 4
          %s275 = int_to_ptr.vmem [resolvable:$true] %s274
          %277 = dma.hbm_to_vmem [thread:$0]  %s273, 16, %s275, %s265
        $region28: #{tpu_custom_call.1} parent=23 // pred_fallthru
          _
        // Predicated region
        $region29: #{tpu_custom_call.1} parent=23 // pred_check
          %p278 = pneg %p93
        $region30: #{tpu_custom_call.1} parent=23 // pred_check_branch
          %280 = sbr.rel (%p278) target = $region32
        $region31: #{tpu_custom_call.1} parent=23 // pred_region
          %s281 = sand.u32 %s24, 1
          %s282 = scalar_lea.sflag [#allocation7], %s281
          %s283 = sand.u32 %s83, 1
          %s284 = smul.addr %s283, 32
          %s285 = scalar_lea.vmem [#allocation6], %s284
          %s286 = smul.u32 4, %s33
          %288 = vsyncadd %s282, 0
          %s289 = sadd.s32 %s32, %s286
          %s290 = smul.addr %s31, 4
          %s291 = sadd.s32 %s289, %s290
          %s292 = smul.addr %s291, 8
          %s293 = scalar_lea.hbm %s1, %s292
          %s294 = sshll.u32 %s293, 4
          %s295 = int_to_ptr.hbm [resolvable:$true] %s294
          %s296 = sshll.u32 %s285, 4
          %s297 = int_to_ptr.vmem [resolvable:$true] %s296
          %302 = dma.hbm_to_vmem [thread:$0]  %s295, 512, %s297, %s282, 128, 128, 8
        $region32: #{tpu_custom_call.1} parent=23 // pred_fallthru
          _
        // Predicated region
        $region33: #{tpu_custom_call.1} parent=23 // pred_check
          %p303 = pneg %p121
        $region34: #{tpu_custom_call.1} parent=23 // pred_check_branch
          %305 = sbr.rel (%p303) target = $region36
        $region35: #{tpu_custom_call.1} parent=23 // pred_region
          %s306 = sand.u32 %s24, 1
          %s307 = scalar_lea.sflag [#allocation7], %s306
          %s308 = sand.u32 %s111, 1
          %s309 = smul.addr %s308, 32
          %s310 = scalar_lea.vmem [#allocation8], %s309
          %s311 = smul.u32 4, %s33
          %313 = vsyncadd %s307, 0
          %s314 = smul.addr %s31, 4
          %s315 = sadd.s32 %s311, %s314
          %s316 = smul.addr %s315, 8
          %s317 = scalar_lea.hbm %s2, %s316
          %s318 = sshll.u32 %s317, 4
          %s319 = int_to_ptr.hbm [resolvable:$true] %s318
          %s320 = sshll.u32 %s310, 4
          %s321 = int_to_ptr.vmem [resolvable:$true] %s320
          %326 = dma.hbm_to_vmem [thread:$0]  %s319, 512, %s321, %s307, 128, 128, 8
        $region36: #{tpu_custom_call.1} parent=23 // pred_fallthru
          _
        // Predicated region
        $region37: #{tpu_custom_call.1} parent=23 // pred_check
          %p327 = pneg %p149
        $region38: #{tpu_custom_call.1} parent=23 // pred_check_branch
          %329 = sbr.rel (%p327) target = $region40
        $region39: #{tpu_custom_call.1} parent=23 // pred_region
          %s330 = sand.u32 %s24, 1
          %s331 = scalar_lea.sflag [#allocation10], %s330
          %s332 = sand.u32 %s139, 1
          %s333 = smul.addr %s332, 32
          %s334 = scalar_lea.vmem [#allocation9], %s333
          %s335 = smul.u32 4, %s33
          %337 = vsyncadd %s331, 0
          %s338 = smul.addr %s31, 4
          %s339 = sadd.s32 %s335, %s338
          %s340 = smul.addr %s339, 8
          %s341 = scalar_lea.hbm %s3, %s340
          %s342 = sshll.u32 %s341, 4
          %s343 = int_to_ptr.hbm [resolvable:$true] %s342
          %s344 = sshll.u32 %s334, 4
          %s345 = int_to_ptr.vmem [resolvable:$true] %s344
          %350 = dma.hbm_to_vmem [thread:$0]  %s343, 512, %s345, %s331, 128, 128, 8
        $region40: #{tpu_custom_call.1} parent=23 // pred_fallthru
          _
      $region24: #{tpu_custom_call.1} parent=5 // pred_fallthru
        _
      %p351 = scmp.le.s32.totalorder 1, %s24
      %p352 = scmp.lt.s32.totalorder %s24, 3
      %p353 = pnand %p351, %p352
      %p354 = pneg %p353
      // Predicated region
      $region41: #{tpu_custom_call.1} parent=5 // pred_check
        _
      $region42: #{tpu_custom_call.1} parent=5 // pred_check_branch
        %356 = sbr.rel (%p353) target = $region44
      $region43: #{tpu_custom_call.1} parent=5 // pred_region
        %s357 = ssub.s32 %s24, 1
        %s358 = sand.u32 %s56, 1
        %s359 = scalar_lea.sflag [#allocation4], %s358
        %s360 = sand.u32 %s56, 1
        %s361 = scalar_lea.vmem [#allocation3], %s360
        // Predicated region
        $region45: #{tpu_custom_call.1} parent=43 // pred_check
          %p362 = pneg %p69
        $region46: #{tpu_custom_call.1} parent=43 // pred_check_branch
          %364 = sbr.rel (%p362) target = $region48
        $region47: #{tpu_custom_call.1} parent=43 // pred_region
          %366 = dma.done %s359, 16
        $region48: #{tpu_custom_call.1} parent=43 // pred_fallthru
          _
        %s367 = sand.u32 %s29, 1
        %s368 = scalar_lea.sflag [#allocation7], %s367
        %s369 = sand.u32 %s86, 1
        %s370 = smul.addr %s369, 32
        %s371 = scalar_lea.vmem [#allocation6], %s370
        // Predicated region
        $region49: #{tpu_custom_call.1} parent=43 // pred_check
          %p372 = pneg %p99
        $region50: #{tpu_custom_call.1} parent=43 // pred_check_branch
          %374 = sbr.rel (%p372) target = $region52
        $region51: #{tpu_custom_call.1} parent=43 // pred_region
          %376 = dma.done %s368, 512
        $region52: #{tpu_custom_call.1} parent=43 // pred_fallthru
          _
        %s377 = sand.u32 %s29, 1
        %s378 = scalar_lea.sflag [#allocation7], %s377
        %s379 = sand.u32 %s114, 1
        %s380 = smul.addr %s379, 32
        %s381 = scalar_lea.vmem [#allocation8], %s380
        // Predicated region
        $region53: #{tpu_custom_call.1} parent=43 // pred_check
          %p382 = pneg %p127
        $region54: #{tpu_custom_call.1} parent=43 // pred_check_branch
          %384 = sbr.rel (%p382) target = $region56
        $region55: #{tpu_custom_call.1} parent=43 // pred_region
          %386 = dma.done %s378, 512
        $region56: #{tpu_custom_call.1} parent=43 // pred_fallthru
          _
        %s387 = sand.u32 %s29, 1
        %s388 = scalar_lea.sflag [#allocation10], %s387
        %s389 = sand.u32 %s142, 1
        %s390 = smul.addr %s389, 32
        %s391 = scalar_lea.vmem [#allocation9], %s390
        // Predicated region
        $region57: #{tpu_custom_call.1} parent=43 // pred_check
          %p392 = pneg %p155
        $region58: #{tpu_custom_call.1} parent=43 // pred_check_branch
          %394 = sbr.rel (%p392) target = $region60
        $region59: #{tpu_custom_call.1} parent=43 // pred_region
          %396 = dma.done %s388, 512
        $region60: #{tpu_custom_call.1} parent=43 // pred_fallthru
          _
        // Predicated region
        $region61: #{tpu_custom_call.1} parent=43 // pred_check
          %p397 = pneg %p176
        $region62: #{tpu_custom_call.1} parent=43 // pred_check_branch
          %399 = sbr.rel (%p397) target = $region64
        $region63: #{tpu_custom_call.1} parent=43 // pred_region
          %401 = dma.done [#allocation10], 512
        $region64: #{tpu_custom_call.1} parent=43 // pred_fallthru
          _
        %s402 = sand.u32 %s56, 1
        %s403 = scalar_lea.sflag [#allocation4], %s402
        %s404 = sand.u32 %s56, 1
        %s405 = scalar_lea.vmem [#allocation3], %s404
        %p406 = pneg %p69
        %p407 = pneg %p66
        %s408 = sand.u32 %s29, 1
        %s409 = scalar_lea.sflag [#allocation7], %s408
        %s410 = sand.u32 %s86, 1
        %s411 = smul.addr %s410, 32
        %s412 = scalar_lea.vmem [#allocation6], %s411
        %p413 = pneg %p99
        %p414 = pneg %p96
        %s415 = sand.u32 %s29, 1
        %s416 = scalar_lea.sflag [#allocation7], %s415
        %s417 = sand.u32 %s114, 1
        %s418 = smul.addr %s417, 32
        %s419 = scalar_lea.vmem [#allocation8], %s418
        %p420 = pneg %p127
        %p421 = pneg %p124
        %s422 = sand.u32 %s29, 1
        %s423 = scalar_lea.sflag [#allocation10], %s422
        %s424 = sand.u32 %s142, 1
        %s425 = smul.addr %s424, 32
        %s426 = scalar_lea.vmem [#allocation9], %s425
        %p427 = pneg %p155
        %p428 = pneg %p152
        %p429 = pneg %p176
        %p430 = pneg %p173
        %p431 = pneg %p197
        %p432 = pneg %p194
        %p433 = pneg %p225
        %p434 = pneg %p222
        %s435 = sand.u32 %s212, 1
        %s436 = scalar_lea.sflag [#allocation5], %s435
        %s437 = sand.u32 %s212, 1
        %s438 = smul.addr %s437, 8
        %s439 = scalar_lea.vmem [#allocation12], %s438
        %s440 = smul.u32 4, %s36
        %s441 = smul.u32 4, %s36
        %s442 = smul.u32 4, %s36
        %v443 = vlaneseq
        %v444 = vshrl.u32 %v443, 7
        %s445 = smul.u32 %s35, 8
        %v446 = vstv %s445
        %v447 = vadd.s32 %v444, %v446
        %v448 = vlaneseq
        %v449 = vand.u32 %v448, 127
        %vm450 = vcmp.le.s32.totalorder %v449, %v447
        %v451 = vld [vmem:[%s361] sm:$0x1]
        %vm452 = vcmp.ne.f32.partialorder %v451, 0.0
        %v453 = vsel %vm452, 1, 0
        %v454 = vperm.slane %v453, 0
        %vm455 = vcmp.eq.s32.totalorder %v454, 1
        %vm456 = vmand %vm450, %vm455
        %v457 = vld [vmem:[%s371] sm:$0xff]
        %v458 = vld [vmem:[%s381] sm:$0xff]
        %v459 = vld [vmem:[%s391] sm:$0xff]
        %vm460 = vcmask 64512
        %v462 = vsel %vm460, %v457, 0
        %v465 = vsel %vm460, %v458, 0
        %467 = vmatpush.xpose.msra.mxu0 0.0
        %468 = vmatpush.xpose.msra.mxu0 0.0
        %469 = vmatpush.xpose.msra.mxu0 0.0
        %470 = vmatpush.xpose.msra.mxu0 0.0
        %471 = vmatpush.xpose.msra.mxu0 0.0
        %472 = vmatpush.xpose.msra.mxu0 0.0
        %473 = vmatpush.xpose.msra.mxu0 0.0
        %474 = vmatpush.xpose.msra.mxu0 0.0
        %475 = vmatpush.xpose.msra.mxu0 0.0
        %476 = vmatpush.xpose.msra.mxu0 0.0
        %477 = vmatpush.xpose.msra.mxu0 0.0
        %478 = vmatpush.xpose.msra.mxu0 0.0
        %479 = vmatpush.xpose.msra.mxu0 0.0
        %480 = vmatpush.xpose.msra.mxu0 0.0
        %481 = vmatpush.xpose.msra.mxu0 0.0
        %482 = vmatpush.xpose.msra.mxu0 %v465
        %483 = vmatmul.f32.gmra.mxu0 %v462
        %v484 = vpop.f32.mrf.mxu0
        %v485 = vadd.f32 0.0, %v484
        %486 = vdwg.mxu0
        %v487 = vsel %vm456, %v485, -1000000.0
        %v488 = vsel %vm460, %v487, -inf
        %489 = vmax.xlane.f32.xlu0 %v488
        %v490 = vpop.xlane.xlu0 %489
        %v491 = vsub.f32 %v487, %v490
        %v492 = vmul.f32 %v491, 1.442695
        %v493 = vpow.pop %v492
        %v494 = vsel %vm460, %v493, 0.0
        %495 = vadd.xlane.f32.xlu0 %v494
        %v496 = vpop.xlane.xlu0 %495
        %v497 = vrcp.pop %v496
        %v498 = vmul.f32 %v496, %v497
        %v499 = vsub.f32 1.0, %v498
        %v500 = vmul.f32 %v497, %v499
        %v501 = vadd.f32 %v497, %v500
        %vm502 = vweird.f32 %v496
        %vm503 = vweird.f32 %v497
        %vm504 = vmor %vm502, %vm503
        %v505 = vsel %vm504, %v497, %v501
        %v506 = vand.u32 2147483647, %v496
        %vm507 = vcmp.eq.f32.partialorder %v506, 8.507059e+37
        %v508 = vand.u32 %v496, 2147483648
        %v509 = vor.u32 1.1754944e-38, %v508
        %v510 = vsel %vm507, %v509, %v505
        %v511 = vmul.f32 %v493, %v510
        %v513 = vsel %vm460, %v511, 0
        %515 = vmatpush.msra.mxu0 0.0
        %516 = vmatpush.msra.mxu0 0.0
        %517 = vmatpush.msra.mxu0 0.0
        %518 = vmatpush.msra.mxu0 0.0
        %519 = vmatpush.msra.mxu0 0.0
        %520 = vmatpush.msra.mxu0 0.0
        %521 = vmatpush.msra.mxu0 0.0
        %522 = vmatpush.msra.mxu0 0.0
        %523 = vmatpush.msra.mxu0 0.0
        %524 = vmatpush.msra.mxu0 0.0
        %525 = vmatpush.msra.mxu0 0.0
        %526 = vmatpush.msra.mxu0 0.0
        %527 = vmatpush.msra.mxu0 0.0
        %528 = vmatpush.msra.mxu0 0.0
        %529 = vmatpush.msra.mxu0 0.0
        %530 = vmatpush.msra.mxu0 %v459
        %531 = vmatmul.f32.gmra.mxu0 %v513
        %v532 = vpop.f32.mrf.mxu0
        %v533 = vadd.f32 0.0, %v532
        %534 = vdwg.mxu0
        %s535 = scalar_lea.vmem %s371, 8 [#allocation6]
        %v536 = vld [vmem:[%s535] sm:$0xff]
        %s537 = scalar_lea.vmem %s381, 8 [#allocation8]
        %v538 = vld [vmem:[%s537] sm:$0xff]
        %s539 = scalar_lea.vmem %s391, 8 [#allocation9]
        %v540 = vld [vmem:[%s539] sm:$0xff]
        %v542 = vsel %vm460, %v536, 0
        %v545 = vsel %vm460, %v538, 0
        %547 = vmatpush.xpose.msra.mxu0 0.0
        %548 = vmatpush.xpose.msra.mxu0 0.0
        %549 = vmatpush.xpose.msra.mxu0 0.0
        %550 = vmatpush.xpose.msra.mxu0 0.0
        %551 = vmatpush.xpose.msra.mxu0 0.0
        %552 = vmatpush.xpose.msra.mxu0 0.0
        %553 = vmatpush.xpose.msra.mxu0 0.0
        %554 = vmatpush.xpose.msra.mxu0 0.0
        %555 = vmatpush.xpose.msra.mxu0 0.0
        %556 = vmatpush.xpose.msra.mxu0 0.0
        %557 = vmatpush.xpose.msra.mxu0 0.0
        %558 = vmatpush.xpose.msra.mxu0 0.0
        %559 = vmatpush.xpose.msra.mxu0 0.0
        %560 = vmatpush.xpose.msra.mxu0 0.0
        %561 = vmatpush.xpose.msra.mxu0 0.0
        %562 = vmatpush.xpose.msra.mxu0 %v545
        %563 = vmatmul.f32.gmra.mxu0 %v542
        %v564 = vpop.f32.mrf.mxu0
        %v565 = vadd.f32 0.0, %v564
        %566 = vdwg.mxu0
        %v567 = vsel %vm456, %v565, -1000000.0
        %v568 = vsel %vm460, %v567, -inf
        %569 = vmax.xlane.f32.xlu0 %v568
        %v570 = vpop.xlane.xlu0 %569
        %v571 = vsub.f32 %v567, %v570
        %v572 = vmul.f32 %v571, 1.442695
        %v573 = vpow.pop %v572
        %v574 = vsel %vm460, %v573, 0.0
        %575 = vadd.xlane.f32.xlu0 %v574
        %v576 = vpop.xlane.xlu0 %575
        %v577 = vrcp.pop %v576
        %v578 = vmul.f32 %v576, %v577
        %v579 = vsub.f32 1.0, %v578
        %v580 = vmul.f32 %v577, %v579
        %v581 = vadd.f32 %v577, %v580
        %vm582 = vweird.f32 %v576
        %vm583 = vweird.f32 %v577
        %vm584 = vmor %vm582, %vm583
        %v585 = vsel %vm584, %v577, %v581
        %v586 = vand.u32 2147483647, %v576
        %vm587 = vcmp.eq.f32.partialorder %v586, 8.507059e+37
        %v588 = vand.u32 %v576, 2147483648
        %v589 = vor.u32 1.1754944e-38, %v588
        %v590 = vsel %vm587, %v589, %v585
        %v591 = vmul.f32 %v573, %v590
        %v593 = vsel %vm460, %v591, 0
        %595 = vmatpush.msra.mxu0 0.0
        %596 = vmatpush.msra.mxu0 0.0
        %597 = vmatpush.msra.mxu0 0.0
        %598 = vmatpush.msra.mxu0 0.0
        %599 = vmatpush.msra.mxu0 0.0
        %600 = vmatpush.msra.mxu0 0.0
        %601 = vmatpush.msra.mxu0 0.0
        %602 = vmatpush.msra.mxu0 0.0
        %603 = vmatpush.msra.mxu0 0.0
        %604 = vmatpush.msra.mxu0 0.0
        %605 = vmatpush.msra.mxu0 0.0
        %606 = vmatpush.msra.mxu0 0.0
        %607 = vmatpush.msra.mxu0 0.0
        %608 = vmatpush.msra.mxu0 0.0
        %609 = vmatpush.msra.mxu0 0.0
        %610 = vmatpush.msra.mxu0 %v540
        %611 = vmatmul.f32.gmra.mxu0 %v593
        %v612 = vpop.f32.mrf.mxu0
        %v613 = vadd.f32 0.0, %v612
        %614 = vdwg.mxu0
        %s615 = scalar_lea.vmem %s371, 16 [#allocation6]
        %v616 = vld [vmem:[%s615] sm:$0xff]
        %s617 = scalar_lea.vmem %s381, 16 [#allocation8]
        %v618 = vld [vmem:[%s617] sm:$0xff]
        %s619 = scalar_lea.vmem %s391, 16 [#allocation9]
        %v620 = vld [vmem:[%s619] sm:$0xff]
        %v622 = vsel %vm460, %v616, 0
        %v625 = vsel %vm460, %v618, 0
        %627 = vmatpush.xpose.msra.mxu0 0.0
        %628 = vmatpush.xpose.msra.mxu0 0.0
        %629 = vmatpush.xpose.msra.mxu0 0.0
        %630 = vmatpush.xpose.msra.mxu0 0.0
        %631 = vmatpush.xpose.msra.mxu0 0.0
        %632 = vmatpush.xpose.msra.mxu0 0.0
        %633 = vmatpush.xpose.msra.mxu0 0.0
        %634 = vmatpush.xpose.msra.mxu0 0.0
        %635 = vmatpush.xpose.msra.mxu0 0.0
        %636 = vmatpush.xpose.msra.mxu0 0.0
        %637 = vmatpush.xpose.msra.mxu0 0.0
        %638 = vmatpush.xpose.msra.mxu0 0.0
        %639 = vmatpush.xpose.msra.mxu0 0.0
        %640 = vmatpush.xpose.msra.mxu0 0.0
        %641 = vmatpush.xpose.msra.mxu0 0.0
        %642 = vmatpush.xpose.msra.mxu0 %v625
        %643 = vmatmul.f32.gmra.mxu0 %v622
        %v644 = vpop.f32.mrf.mxu0
        %v645 = vadd.f32 0.0, %v644
        %646 = vdwg.mxu0
        %v647 = vsel %vm456, %v645, -1000000.0
        %v648 = vsel %vm460, %v647, -inf
        %649 = vmax.xlane.f32.xlu0 %v648
        %v650 = vpop.xlane.xlu0 %649
        %v651 = vsub.f32 %v647, %v650
        %v652 = vmul.f32 %v651, 1.442695
        %v653 = vpow.pop %v652
        %v654 = vsel %vm460, %v653, 0.0
        %655 = vadd.xlane.f32.xlu0 %v654
        %v656 = vpop.xlane.xlu0 %655
        %v657 = vrcp.pop %v656
        %v658 = vmul.f32 %v656, %v657
        %v659 = vsub.f32 1.0, %v658
        %v660 = vmul.f32 %v657, %v659
        %v661 = vadd.f32 %v657, %v660
        %vm662 = vweird.f32 %v656
        %vm663 = vweird.f32 %v657
        %vm664 = vmor %vm662, %vm663
        %v665 = vsel %vm664, %v657, %v661
        %v666 = vand.u32 2147483647, %v656
        %vm667 = vcmp.eq.f32.partialorder %v666, 8.507059e+37
        %v668 = vand.u32 %v656, 2147483648
        %v669 = vor.u32 1.1754944e-38, %v668
        %v670 = vsel %vm667, %v669, %v665
        %v671 = vmul.f32 %v653, %v670
        %v673 = vsel %vm460, %v671, 0
        %675 = vmatpush.msra.mxu0 0.0
        %676 = vmatpush.msra.mxu0 0.0
        %677 = vmatpush.msra.mxu0 0.0
        %678 = vmatpush.msra.mxu0 0.0
        %679 = vmatpush.msra.mxu0 0.0
        %680 = vmatpush.msra.mxu0 0.0
        %681 = vmatpush.msra.mxu0 0.0
        %682 = vmatpush.msra.mxu0 0.0
        %683 = vmatpush.msra.mxu0 0.0
        %684 = vmatpush.msra.mxu0 0.0
        %685 = vmatpush.msra.mxu0 0.0
        %686 = vmatpush.msra.mxu0 0.0
        %687 = vmatpush.msra.mxu0 0.0
        %688 = vmatpush.msra.mxu0 0.0
        %689 = vmatpush.msra.mxu0 0.0
        %690 = vmatpush.msra.mxu0 %v620
        %691 = vmatmul.f32.gmra.mxu0 %v673
        %v692 = vpop.f32.mrf.mxu0
        %v693 = vadd.f32 0.0, %v692
        %694 = vdwg.mxu0
        %s695 = scalar_lea.vmem %s371, 24 [#allocation6]
        %v696 = vld [vmem:[%s695] sm:$0xff]
        %s697 = scalar_lea.vmem %s381, 24 [#allocation8]
        %v698 = vld [vmem:[%s697] sm:$0xff]
        %s699 = scalar_lea.vmem %s391, 24 [#allocation9]
        %v700 = vld [vmem:[%s699] sm:$0xff]
        %v702 = vsel %vm460, %v696, 0
        %v705 = vsel %vm460, %v698, 0
        %707 = vmatpush.xpose.msra.mxu0 0.0
        %708 = vmatpush.xpose.msra.mxu0 0.0
        %709 = vmatpush.xpose.msra.mxu0 0.0
        %710 = vmatpush.xpose.msra.mxu0 0.0
        %711 = vmatpush.xpose.msra.mxu0 0.0
        %712 = vmatpush.xpose.msra.mxu0 0.0
        %713 = vmatpush.xpose.msra.mxu0 0.0
        %714 = vmatpush.xpose.msra.mxu0 0.0
        %715 = vmatpush.xpose.msra.mxu0 0.0
        %716 = vmatpush.xpose.msra.mxu0 0.0
        %717 = vmatpush.xpose.msra.mxu0 0.0
        %718 = vmatpush.xpose.msra.mxu0 0.0
        %719 = vmatpush.xpose.msra.mxu0 0.0
        %720 = vmatpush.xpose.msra.mxu0 0.0
        %721 = vmatpush.xpose.msra.mxu0 0.0
        %722 = vmatpush.xpose.msra.mxu0 %v705
        %723 = vmatmul.f32.gmra.mxu0 %v702
        %v724 = vpop.f32.mrf.mxu0
        %v725 = vadd.f32 0.0, %v724
        %726 = vdwg.mxu0
        %v727 = vsel %vm456, %v725, -1000000.0
        %v728 = vsel %vm460, %v727, -inf
        %729 = vmax.xlane.f32.xlu0 %v728
        %v730 = vpop.xlane.xlu0 %729
        %v731 = vsub.f32 %v727, %v730
        %v732 = vmul.f32 %v731, 1.442695
        %v733 = vpow.pop %v732
        %v734 = vsel %vm460, %v733, 0.0
        %735 = vadd.xlane.f32.xlu0 %v734
        %v736 = vpop.xlane.xlu0 %735
        %v737 = vrcp.pop %v736
        %v738 = vmul.f32 %v736, %v737
        %v739 = vsub.f32 1.0, %v738
        %v740 = vmul.f32 %v737, %v739
        %v741 = vadd.f32 %v737, %v740
        %vm742 = vweird.f32 %v736
        %vm743 = vweird.f32 %v737
        %vm744 = vmor %vm742, %vm743
        %v745 = vsel %vm744, %v737, %v741
        %v746 = vand.u32 2147483647, %v736
        %vm747 = vcmp.eq.f32.partialorder %v746, 8.507059e+37
        %v748 = vand.u32 %v736, 2147483648
        %v749 = vor.u32 1.1754944e-38, %v748
        %v750 = vsel %vm747, %v749, %v745
        %v751 = vmul.f32 %v733, %v750
        %v753 = vsel %vm460, %v751, 0
        %755 = vmatpush.msra.mxu0 0.0
        %756 = vmatpush.msra.mxu0 0.0
        %757 = vmatpush.msra.mxu0 0.0
        %758 = vmatpush.msra.mxu0 0.0
        %759 = vmatpush.msra.mxu0 0.0
        %760 = vmatpush.msra.mxu0 0.0
        %761 = vmatpush.msra.mxu0 0.0
        %762 = vmatpush.msra.mxu0 0.0
        %763 = vmatpush.msra.mxu0 0.0
        %764 = vmatpush.msra.mxu0 0.0
        %765 = vmatpush.msra.mxu0 0.0
        %766 = vmatpush.msra.mxu0 0.0
        %767 = vmatpush.msra.mxu0 0.0
        %768 = vmatpush.msra.mxu0 0.0
        %769 = vmatpush.msra.mxu0 0.0
        %770 = vmatpush.msra.mxu0 %v700
        %771 = vmatmul.f32.gmra.mxu0 %v753
        %v772 = vpop.f32.mrf.mxu0
        %v773 = vadd.f32 0.0, %v772
        %774 = vdwg.mxu0
        %776 = vrot.lane.b32.xlu0 %v613, 8
        %v777 = vpop.permute.xlu0 %776
        %780 = vrot.lane.b32.xlu0 %v693, 16
        %v781 = vpop.permute.xlu0 %780
        %784 = vrot.lane.b32.xlu0 %v773, 24
        %v785 = vpop.permute.xlu0 %784
        %v787 = vsel %vm460, %v533, %v777
        %vm788 = vcmask 130048
        %v789 = vsel %vm788, %v787, %v781
        %vm790 = vcmask 195584
        %v791 = vsel %vm790, %v789, %v785
        %vm792 = vcmask 261120
        %793 = vst.msk [vmem:[#allocation2] sm:$0xff] %vm792, %v791
        %v794 = vld [vmem:[#allocation2] sm:$0xff]
        %v795 = vld [vmem:[#allocation11] sm:$0xff]
        %v796 = vld [vmem:[#allocation11 + $0x8] sm:$0xff]
        %v797 = vld [vmem:[#allocation11 + $0x10] sm:$0xff]
        %v798 = vld [vmem:[#allocation11 + $0x18] sm:$0xff]
        %v799 = vld [vmem:[%s5] sm:$0x1]
        %v801 = vperm.slane %v799, 0
        %v804 = vsel %vm792, %v794, 0
        %806 = vmatpush.msra.mxu0 0.0
        %807 = vmatpush.msra.mxu0 0.0
        %808 = vmatpush.msra.mxu0 0.0
        %809 = vmatpush.msra.mxu0 0.0
        %810 = vmatpush.msra.mxu0 0.0
        %811 = vmatpush.msra.mxu0 0.0
        %812 = vmatpush.msra.mxu0 0.0
        %813 = vmatpush.msra.mxu0 0.0
        %814 = vmatpush.msra.mxu0 0.0
        %815 = vmatpush.msra.mxu0 0.0
        %816 = vmatpush.msra.mxu0 0.0
        %817 = vmatpush.msra.mxu0 0.0
        %818 = vmatpush.msra.mxu0 %v798
        %819 = vmatpush.msra.mxu0 %v797
        %820 = vmatpush.msra.mxu0 %v796
        %821 = vmatpush.msra.mxu0 %v795
        %822 = vmatmul.f32.gmra.mxu0 %v804
        %v823 = vpop.f32.mrf.mxu0
        %v824 = vadd.f32 %v801, %v823
        %825 = vdwg.mxu0
        %826 = vst.msk [vmem:[%s439] sm:$0xff] %vm792, %v824
        %s827 = sand.u32 %s212, 1
        %s828 = scalar_lea.sflag [#allocation5], %s827
        %s829 = sand.u32 %s212, 1
        %s830 = smul.addr %s829, 8
        %s831 = scalar_lea.vmem [#allocation12], %s830
        // Predicated region
        $region65: #{tpu_custom_call.1} parent=43 // pred_check
          %p832 = pneg %p222
        $region66: #{tpu_custom_call.1} parent=43 // pred_check_branch
          %834 = sbr.rel (%p832) target = $region68
        $region67: #{tpu_custom_call.1} parent=43 // pred_region
          %836 = vsyncadd %s828, 0
          %s837 = sadd.s32 %s35, %s34
          %s838 = smul.addr %s837, 8
          %s839 = scalar_lea.hbm %s6, %s838
          %s841 = sshll.u32 %s831, 4
          %s842 = int_to_ptr.vmem [resolvable:$true] %s841
          %s843 = sshll.u32 %s839, 4
          %s844 = int_to_ptr.hbm [resolvable:$true] %s843
          %846 = dma.vmem_to_hbm [thread:$0]  %s842, 128, %s844, %s828
        $region68: #{tpu_custom_call.1} parent=43 // pred_fallthru
          _
      $region44: #{tpu_custom_call.1} parent=5 // pred_fallthru
        _
      %p847 = scmp.le.s32.totalorder 2, %s24
      // Predicated region
      $region69: #{tpu_custom_call.1} parent=5 // pred_check
        %p848 = pneg %p847
      $region70: #{tpu_custom_call.1} parent=5 // pred_check_branch
        %850 = sbr.rel (%p848) target = $region72
      $region71: #{tpu_custom_call.1} parent=5 // pred_region
        %s851 = ssub.s32 %s24, 2
        // Predicated region
        $region73: #{tpu_custom_call.1} parent=71 // pred_check
          %p852 = pneg %p228
        $region74: #{tpu_custom_call.1} parent=71 // pred_check_branch
          %854 = sbr.rel (%p852) target = $region76
        $region75: #{tpu_custom_call.1} parent=71 // pred_region
          %s855 = sand.u32 %s213, 1
          %s856 = scalar_lea.sflag [#allocation5], %s855
          %s857 = sand.u32 %s213, 1
          %s858 = smul.addr %s857, 8
          %s859 = scalar_lea.vmem [#allocation12], %s858
          %861 = dma.done %s856, 128
        $region76: #{tpu_custom_call.1} parent=71 // pred_fallthru
          _
      $region72: #{tpu_custom_call.1} parent=5 // pred_fallthru
        _
    $region6: #{tpu_custom_call.1} parent=1 // loop_footer
      %s28 = sadd.s32 1, %s24
    $region7: #{tpu_custom_call.1} parent=1 // loop_footer_branch
      %23 = sbr.rel target = $region3
    $region8: #{tpu_custom_call.1} parent=1 // loop_exit
      _
    %862 = vsyncpa [#allocation4], 1
    %s863 = scalar_lea.sflag [#allocation4], 1
    %864 = vsyncpa %s863, 1
    %865 = vsyncpa [#allocation7], 1
    %s866 = scalar_lea.sflag [#allocation7], 1
    %867 = vsyncpa %s866, 1
    %868 = vsyncpa [#allocation10], 1
    %s869 = scalar_lea.sflag [#allocation10], 1
    %870 = vsyncpa %s869, 1
    %871 = vsyncpa [#allocation5], 1
    %s872 = scalar_lea.sflag [#allocation5], 1
    %873 = vsyncpa %s872, 1

// kernel: tpu_custom_call.1
$region0: #{tpu_custom_call.1}
  #allocation0 [shape = 'u32[]', space=smem, size = 0x4, offset = 0x4, fixed_abs, tag = 'smem constant byte address 0x4 - core index']
  #allocation1 [shape = 'u32[72,128]{1,0:T(1,128)}', space=vmem, size = 0x9000, scoped, tag = 'internal scratch']
  #allocation2 [shape = 'f32[1,8,32]{2,1,0:T(8,128)}', space=vmem, size = 0x1000, scoped, tag = 'scratch operand']
  %s0 = inlined_call_operand.hbm [shape: f32[2,1,8], index: 0, kind: input, shape index: {}]
  %s1 = inlined_call_operand.hbm [shape: f32[2,4,8,8], index: 1, kind: input, shape index: {}]
  %s2 = inlined_call_operand.hbm [shape: f32[2,4,8,8], index: 2, kind: input, shape index: {}]
  %s3 = inlined_call_operand.hbm [shape: f32[2,4,8,8], index: 3, kind: input, shape index: {}]
  %s4 = inlined_call_operand.hbm [shape: f32[32,32], index: 4, kind: input, shape index: {}]
  %s5 = inlined_call_operand.vmem [shape: f32[1,32], index: 5, kind: input, shape index: {}]
  %s6 = inlined_call_operand.hbm [shape: f32[2,8,32], index: 6, kind: output, shape index: {}]
  %s7 = sld [smem:[#allocation0]]
  $region77: #{tpu_custom_call.1} parent=0
    _
  %s9 = ssub.s32 1, %s7
  %s10 = scalar_select 0, %s9, %s7
  $region1: #{tpu_custom_call.1} parent=0
    #allocation3 [shape = 'u8[1024]{0}', space=vmem, size = 0x400, scoped, tag = 'input window, operand 0']
    #allocation4 [shape = 's32[2]{0}', space=sflag, size = 0x8, scoped, tag = 'scoped memory for tpu_custom_call.1']
    #allocation5 [shape = 's32[2]{0}', space=sflag, size = 0x8, scoped, tag = 'scoped memory for tpu_custom_call.1']
    #allocation6 [shape = 'u8[32768]{0}', space=vmem, size = 0x8000, scoped, tag = 'input window, operand 1']
    #allocation7 [shape = 's32[2]{0}', space=sflag, size = 0x8, scoped, tag = 'scoped memory for tpu_custom_call.1']
    #allocation8 [shape = 'u8[32768]{0}', space=vmem, size = 0x8000, scoped, tag = 'input window, operand 2']
    #allocation9 [shape = 'u8[32768]{0}', space=vmem, size = 0x8000, scoped, tag = 'input window, operand 3']
    #allocation10 [shape = 's32[2]{0}', space=sflag, size = 0x8, scoped, tag = 'scoped memory for tpu_custom_call.1']
    #allocation11 [shape = 'u8[16384]{0}', space=vmem, size = 0x4000, scoped, tag = 'input window, operand 4, single buffered']
    #allocation12 [shape = 'u8[8192]{0}', space=vmem, size = 0x2000, scoped, tag = 'output window, operand 0']
    %11 = vsyncpa [#allocation4], 0
    %s12 = scalar_lea.sflag [#allocation4], 1
    %13 = vsyncpa %s12, 0
    %14 = vsyncpa [#allocation7], 0
    %s15 = scalar_lea.sflag [#allocation7], 1
    %16 = vsyncpa %s15, 0
    %17 = vsyncpa [#allocation10], 0
    %s18 = scalar_lea.sflag [#allocation10], 1
    %19 = vsyncpa %s18, 0
    %20 = vsyncpa [#allocation5], 0
    %s21 = scalar_lea.sflag [#allocation5], 1
    %22 = vsyncpa %s21, 0
    loop: start=0, step=1, limit=4
    $region2: #{tpu_custom_call.1} parent=1 // loop_pre_header
      _
    $region3: #{tpu_custom_call.1} parent=1 // loop_header
      %s24 = sphi 0, %s28
      %p25 = scmp.ge.s32.totalorder %s24, 4
      %s31 = sphi 0, %s50
      %s32 = sphi 0, %s46
      %s33 = sphi 0, %s42
      %s34 = sphi 0, %s31
      %s35 = sphi 0, %s32
      %s36 = sphi 0, %s33
      %s37 = sphi 0, %s34
      %s38 = sphi 0, %s35
      %s39 = sphi 0, %s36
      %s53 = sphi 0, %s55
      %s56 = sphi 0, %s53
      %s57 = sphi 0, %s56
      %s73 = sphi 0, %s57
      %s83 = sphi 0, %s85
      %s86 = sphi 0, %s83
      %s87 = sphi 0, %s86
      %s103 = sphi 0, %s87
      %s111 = sphi 0, %s113
      %s114 = sphi 0, %s111
      %s115 = sphi 0, %s114
      %s131 = sphi 0, %s115
      %s139 = sphi 0, %s141
      %s142 = sphi 0, %s139
      %s143 = sphi 0, %s142
      %s159 = sphi 0, %s143
      %s163 = sphi 0, %s163
      %s165 = sphi 0, %s163
      %s166 = sphi 0, %s165
      %s180 = sphi 0, %s166
      %s184 = sphi 0, %s184
      %s186 = sphi 0, %s184
      %s187 = sphi 0, %s186
      %s201 = sphi 0, %s187
      %s209 = sphi 0, %s211
      %s212 = sphi 0, %s209
      %s213 = sphi 0, %s212
      %s229 = sphi 0, %s213
    $region4: #{tpu_custom_call.1} parent=1 // loop_header_branch
      %27 = sbr.rel (%p25) target = $region8
    $region5: #{tpu_custom_call.1} parent=1 // loop_body
      %s29 = ssub.s32 %s24, 1
      %s30 = ssub.s32 %s24, 2
      %s40 = sadd.s32 1, %s33
      %p41 = scmp.ge.s32.totalorder %s40, 1
      %s42 = scalar_select %p41, 0, %s40
      %s43 = sadd.s32 1, %s32
      %s44 = scalar_select %p41, %s43, %s32
      %p45 = scmp.ge.s32.totalorder %s44, 1
      %s46 = scalar_select %p45, 0, %s44
      %s47 = sadd.s32 1, %s31
      %s48 = scalar_select %p45, %s47, %s31
      %p49 = scmp.ge.s32.totalorder %s48, 2
      %s50 = scalar_select %p49, 0, %s48
      %s51 = ssub.s32 %s31, %s50
      %p52 = scmp.eq.s32.totalorder %s51, 0
      %s54 = sadd.s32 %s53, 1
      %s55 = scalar_select %p52, %s53, %s54
      %p58 = pneg %p52
      %p59 = scmp.eq.s32.totalorder %s24, 1
      %p60 = por %p58, %p59
      %p61 = scmp.ne.s32.totalorder %s53, %s56
      %p62 = scmp.eq.s32.totalorder %s24, 0
      %p63 = por %p61, %p62
      %p64 = scmp.ne.s32.totalorder %s53, %s56
      %p65 = scmp.eq.s32.totalorder %s29, 1
      %p66 = por %p64, %p65
      %p67 = scmp.ne.s32.totalorder %s56, %s57
      %p68 = scmp.eq.s32.totalorder %s29, 0
      %p69 = por %p67, %p68
      %p70 = scmp.ne.s32.totalorder %s56, %s57
      %p71 = scmp.eq.s32.totalorder %s30, 1
      %p72 = por %p70, %p71
      %p74 = scmp.ne.s32.totalorder %s57, %s73
      %p75 = scmp.eq.s32.totalorder %s30, 0
      %p76 = por %p74, %p75
      %s77 = ssub.s32 %s31, %s50
      %s78 = ssub.s32 %s33, %s42
      %s79 = sor.u32 %s77, %s78
      %s80 = ssub.s32 %s32, %s46
      %s81 = sor.u32 %s79, %s80
      %p82 = scmp.eq.s32.totalorder %s81, 0
      %s84 = sadd.s32 %s83, 1
      %s85 = scalar_select %p82, %s83, %s84
      %p88 = pneg %p82
      %p89 = scmp.eq.s32.totalorder %s24, 1
      %p90 = por %p88, %p89
      %p91 = scmp.ne.s32.totalorder %s83, %s86
      %p92 = scmp.eq.s32.totalorder %s24, 0
      %p93 = por %p91, %p92
      %p94 = scmp.ne.s32.totalorder %s83, %s86
      %p95 = scmp.eq.s32.totalorder %s29, 1
      %p96 = por %p94, %p95
      %p97 = scmp.ne.s32.totalorder %s86, %s87
      %p98 = scmp.eq.s32.totalorder %s29, 0
      %p99 = por %p97, %p98
      %p100 = scmp.ne.s32.totalorder %s86, %s87
      %p101 = scmp.eq.s32.totalorder %s30, 1
      %p102 = por %p100, %p101
      %p104 = scmp.ne.s32.totalorder %s87, %s103
      %p105 = scmp.eq.s32.totalorder %s30, 0
      %p106 = por %p104, %p105
      %s107 = ssub.s32 %s31, %s50
      %s108 = ssub.s32 %s33, %s42
      %s109 = sor.u32 %s107, %s108
      %p110 = scmp.eq.s32.totalorder %s109, 0
      %s112 = sadd.s32 %s111, 1
      %s113 = scalar_select %p110, %s111, %s112
      %p116 = pneg %p110
      %p117 = scmp.eq.s32.totalorder %s24, 1
      %p118 = por %p116, %p117
      %p119 = scmp.ne.s32.totalorder %s111, %s114
      %p120 = scmp.eq.s32.totalorder %s24, 0
      %p121 = por %p119, %p120
      %p122 = scmp.ne.s32.totalorder %s111, %s114
      %p123 = scmp.eq.s32.totalorder %s29, 1
      %p124 = por %p122, %p123
      %p125 = scmp.ne.s32.totalorder %s114, %s115
      %p126 = scmp.eq.s32.totalorder %s29, 0
      %p127 = por %p125, %p126
      %p128 = scmp.ne.s32.totalorder %s114, %s115
      %p129 = scmp.eq.s32.totalorder %s30, 1
      %p130 = por %p128, %p129
      %p132 = scmp.ne.s32.totalorder %s115, %s131
      %p133 = scmp.eq.s32.totalorder %s30, 0
      %p134 = por %p132, %p133
      %s135 = ssub.s32 %s31, %s50
      %s136 = ssub.s32 %s33, %s42
      %s137 = sor.u32 %s135, %s136
      %p138 = scmp.eq.s32.totalorder %s137, 0
      %s140 = sadd.s32 %s139, 1
      %s141 = scalar_select %p138, %s139, %s140
      %p144 = pneg %p138
      %p145 = scmp.eq.s32.totalorder %s24, 1
      %p146 = por %p144, %p145
      %p147 = scmp.ne.s32.totalorder %s139, %s142
      %p148 = scmp.eq.s32.totalorder %s24, 0
      %p149 = por %p147, %p148
      %p150 = scmp.ne.s32.totalorder %s139, %s142
      %p151 = scmp.eq.s32.totalorder %s29, 1
      %p152 = por %p150, %p151
      %p153 = scmp.ne.s32.totalorder %s142, %s143
      %p154 = scmp.eq.s32.totalorder %s29, 0
      %p155 = por %p153, %p154
      %p156 = scmp.ne.s32.totalorder %s142, %s143
      %p157 = scmp.eq.s32.totalorder %s30, 1
      %p158 = por %p156, %p157
      %p160 = scmp.ne.s32.totalorder %s143, %s159
      %p161 = scmp.eq.s32.totalorder %s30, 0
      %p162 = por %p160, %p161
      %s164 = sadd.s32 %s163, 1
      %p167 = scmp.eq.s32.totalorder %s24, 1
      %p168 = scmp.ne.s32.totalorder %s163, %s165
      %p169 = scmp.eq.s32.totalorder %s24, 0
      %p170 = por %p168, %p169
      %p171 = scmp.ne.s32.totalorder %s163, %s165
      %p172 = scmp.eq.s32.totalorder %s29, 1
      %p173 = por %p171, %p172
      %p174 = scmp.ne.s32.totalorder %s165, %s166
      %p175 = scmp.eq.s32.totalorder %s29, 0
      %p176 = por %p174, %p175
      %p177 = scmp.ne.s32.totalorder %s165, %s166
      %p178 = scmp.eq.s32.totalorder %s30, 1
      %p179 = por %p177, %p178
      %p181 = scmp.ne.s32.totalorder %s166, %s180
      %p182 = scmp.eq.s32.totalorder %s30, 0
      %p183 = por %p181, %p182
      %s185 = sadd.s32 %s184, 1
      %p188 = scmp.eq.s32.totalorder %s24, 1
      %p189 = scmp.ne.s32.totalorder %s184, %s186
      %p190 = scmp.eq.s32.totalorder %s24, 0
      %p191 = por %p189, %p190
      %p192 = scmp.ne.s32.totalorder %s184, %s186
      %p193 = scmp.eq.s32.totalorder %s29, 1
      %p194 = por %p192, %p193
      %p195 = scmp.ne.s32.totalorder %s186, %s187
      %p196 = scmp.eq.s32.totalorder %s29, 0
      %p197 = por %p195, %p196
      %p198 = scmp.ne.s32.totalorder %s186, %s187
      %p199 = scmp.eq.s32.totalorder %s30, 1
      %p200 = por %p198, %p199
      %p202 = scmp.ne.s32.totalorder %s187, %s201
      %p203 = scmp.eq.s32.totalorder %s30, 0
      %p204 = por %p202, %p203
      %s205 = ssub.s32 %s31, %s50
      %s206 = ssub.s32 %s32, %s46
      %s207 = sor.u32 %s205, %s206
      %p208 = scmp.eq.s32.totalorder %s207, 0
      %s210 = sadd.s32 %s209, 1
      %s211 = scalar_select %p208, %s209, %s210
      %p214 = pneg %p208
      %p215 = scmp.eq.s32.totalorder %s24, 1
      %p216 = por %p214, %p215
      %p217 = scmp.ne.s32.totalorder %s209, %s212
      %p218 = scmp.eq.s32.totalorder %s24, 0
      %p219 = por %p217, %p218
      %p220 = scmp.ne.s32.totalorder %s209, %s212
      %p221 = scmp.eq.s32.totalorder %s29, 1
      %p222 = por %p220, %p221
      %p223 = scmp.ne.s32.totalorder %s212, %s213
      %p224 = scmp.eq.s32.totalorder %s29, 0
      %p225 = por %p223, %p224
      %p226 = scmp.ne.s32.totalorder %s212, %s213
      %p227 = scmp.eq.s32.totalorder %s30, 1
      %p228 = por %p226, %p227
      %p230 = scmp.ne.s32.totalorder %s213, %s229
      %p231 = scmp.eq.s32.totalorder %s30, 0
      %p232 = por %p230, %p231
      %p233 = scmp.le.s32.totalorder 1, %s24
      %p234 = scmp.lt.s32.totalorder %s24, 3
      %p235 = pnand %p233, %p234
      %p236 = pneg %p235
      // Predicated region
      $region9: #{tpu_custom_call.1} parent=5 // pred_check
        _
      $region10: #{tpu_custom_call.1} parent=5 // pred_check_branch
        %238 = sbr.rel (%p235) target = $region12
      $region11: #{tpu_custom_call.1} parent=5 // pred_region
        %s239 = ssub.s32 %s24, 1
        // Predicated region
        $region13: #{tpu_custom_call.1} parent=11 // pred_check
          %p240 = pneg %p176
        $region14: #{tpu_custom_call.1} parent=11 // pred_check_branch
          %242 = sbr.rel (%p240) target = $region16
        $region15: #{tpu_custom_call.1} parent=11 // pred_region
          %244 = vsyncadd [#allocation10], 0
          %s245 = sshll.u32 %s4, 4
          %s246 = int_to_ptr.hbm [resolvable:$true] %s245
          %s247 = sshll.u32 [#allocation11], 4
          %s248 = int_to_ptr.vmem [resolvable:$true] %s247
          %253 = dma.hbm_to_vmem [thread:$0]  %s246, 512, %s248, [#allocation10], 128, 128, 8
        $region16: #{tpu_custom_call.1} parent=11 // pred_fallthru
          _
        // Predicated region
        $region17: #{tpu_custom_call.1} parent=11 // pred_check
          %p254 = pneg %p197
        $region18: #{tpu_custom_call.1} parent=11 // pred_check_branch
          %256 = sbr.rel (%p254) target = $region20
        $region19: #{tpu_custom_call.1} parent=11 // pred_region
          _
        $region20: #{tpu_custom_call.1} parent=11 // pred_fallthru
          _
      $region12: #{tpu_custom_call.1} parent=5 // pred_fallthru
        _
      %p257 = scmp.lt.s32.totalorder %s24, 2
      // Predicated region
      $region21: #{tpu_custom_call.1} parent=5 // pred_check
        %p258 = pneg %p257
      $region22: #{tpu_custom_call.1} parent=5 // pred_check_branch
        %260 = sbr.rel (%p258) target = $region24
      $region23: #{tpu_custom_call.1} parent=5 // pred_region
        // Predicated region
        $region25: #{tpu_custom_call.1} parent=23 // pred_check
          %p261 = pneg %p63
        $region26: #{tpu_custom_call.1} parent=23 // pred_check_branch
          %263 = sbr.rel (%p261) target = $region28
        $region27: #{tpu_custom_call.1} parent=23 // pred_region
          %s264 = sand.u32 %s53, 1
          %s265 = scalar_lea.sflag [#allocation4], %s264
          %s266 = sand.u32 %s53, 1
          %s267 = scalar_lea.vmem [#allocation3], %s266
          %269 = vsyncadd %s265, 0
          %s270 = scalar_lea.hbm %s0, %s31
          %s272 = sshll.u32 %s270, 4
          %s273 = int_to_ptr.hbm [resolvable:$true] %s272
          %s274 = sshll.u32 %s267, 4
          %s275 = int_to_ptr.vmem [resolvable:$true] %s274
          %277 = dma.hbm_to_vmem [thread:$0]  %s273, 16, %s275, %s265
        $region28: #{tpu_custom_call.1} parent=23 // pred_fallthru
          _
        // Predicated region
        $region29: #{tpu_custom_call.1} parent=23 // pred_check
          %p278 = pneg %p93
        $region30: #{tpu_custom_call.1} parent=23 // pred_check_branch
          %280 = sbr.rel (%p278) target = $region32
        $region31: #{tpu_custom_call.1} parent=23 // pred_region
          %s281 = sand.u32 %s24, 1
          %s282 = scalar_lea.sflag [#allocation7], %s281
          %s283 = sand.u32 %s83, 1
          %s284 = smul.addr %s283, 32
          %s285 = scalar_lea.vmem [#allocation6], %s284
          %s286 = smul.u32 4, %s33
          %288 = vsyncadd %s282, 0
          %s289 = sadd.s32 %s32, %s286
          %s290 = smul.addr %s31, 4
          %s291 = sadd.s32 %s289, %s290
          %s292 = smul.addr %s291, 8
          %s293 = scalar_lea.hbm %s1, %s292
          %s294 = sshll.u32 %s293, 4
          %s295 = int_to_ptr.hbm [resolvable:$true] %s294
          %s296 = sshll.u32 %s285, 4
          %s297 = int_to_ptr.vmem [resolvable:$true] %s296
          %302 = dma.hbm_to_vmem [thread:$0]  %s295, 512, %s297, %s282, 128, 128, 8
        $region32: #{tpu_custom_call.1} parent=23 // pred_fallthru
          _
        // Predicated region
        $region33: #{tpu_custom_call.1} parent=23 // pred_check
          %p303 = pneg %p121
        $region34: #{tpu_custom_call.1} parent=23 // pred_check_branch
          %305 = sbr.rel (%p303) target = $region36
        $region35: #{tpu_custom_call.1} parent=23 // pred_region
          %s306 = sand.u32 %s24, 1
          %s307 = scalar_lea.sflag [#allocation7], %s306
          %s308 = sand.u32 %s111, 1
          %s309 = smul.addr %s308, 32
          %s310 = scalar_lea.vmem [#allocation8], %s309
          %s311 = smul.u32 4, %s33
          %313 = vsyncadd %s307, 0
          %s314 = smul.addr %s31, 4
          %s315 = sadd.s32 %s311, %s314
          %s316 = smul.addr %s315, 8
          %s317 = scalar_lea.hbm %s2, %s316
          %s318 = sshll.u32 %s317, 4
          %s319 = int_to_ptr.hbm [resolvable:$true] %s318
          %s320 = sshll.u32 %s310, 4
          %s321 = int_to_ptr.vmem [resolvable:$true] %s320
          %326 = dma.hbm_to_vmem [thread:$0]  %s319, 512, %s321, %s307, 128, 128, 8
        $region36: #{tpu_custom_call.1} parent=23 // pred_fallthru
          _
        // Predicated region
        $region37: #{tpu_custom_call.1} parent=23 // pred_check
          %p327 = pneg %p149
        $region38: #{tpu_custom_call.1} parent=23 // pred_check_branch
          %329 = sbr.rel (%p327) target = $region40
        $region39: #{tpu_custom_call.1} parent=23 // pred_region
          %s330 = sand.u32 %s24, 1
          %s331 = scalar_lea.sflag [#allocation10], %s330
          %s332 = sand.u32 %s139, 1
          %s333 = smul.addr %s332, 32
          %s334 = scalar_lea.vmem [#allocation9], %s333
          %s335 = smul.u32 4, %s33
          %337 = vsyncadd %s331, 0
          %s338 = smul.addr %s31, 4
          %s339 = sadd.s32 %s335, %s338
          %s340 = smul.addr %s339, 8
          %s341 = scalar_lea.hbm %s3, %s340
          %s342 = sshll.u32 %s341, 4
          %s343 = int_to_ptr.hbm [resolvable:$true] %s342
          %s344 = sshll.u32 %s334, 4
          %s345 = int_to_ptr.vmem [resolvable:$true] %s344
          %350 = dma.hbm_to_vmem [thread:$0]  %s343, 512, %s345, %s331, 128, 128, 8
        $region40: #{tpu_custom_call.1} parent=23 // pred_fallthru
          _
      $region24: #{tpu_custom_call.1} parent=5 // pred_fallthru
        _
      %p351 = scmp.le.s32.totalorder 1, %s24
      %p352 = scmp.lt.s32.totalorder %s24, 3
      %p353 = pnand %p351, %p352
      %p354 = pneg %p353
      // Predicated region
      $region41: #{tpu_custom_call.1} parent=5 // pred_check
        _
      $region42: #{tpu_custom_call.1} parent=5 // pred_check_branch
        %356 = sbr.rel (%p353) target = $region44
      $region43: #{tpu_custom_call.1} parent=5 // pred_region
        %s357 = ssub.s32 %s24, 1
        %s358 = sand.u32 %s56, 1
        %s359 = scalar_lea.sflag [#allocation4], %s358
        %s360 = sand.u32 %s56, 1
        %s361 = scalar_lea.vmem [#allocation3], %s360
        // Predicated region
        $region45: #{tpu_custom_call.1} parent=43 // pred_check
          %p362 = pneg %p69
        $region46: #{tpu_custom_call.1} parent=43 // pred_check_branch
          %364 = sbr.rel (%p362) target = $region48
        $region47: #{tpu_custom_call.1} parent=43 // pred_region
          %366 = dma.done %s359, 16
        $region48: #{tpu_custom_call.1} parent=43 // pred_fallthru
          _
        %s367 = sand.u32 %s29, 1
        %s368 = scalar_lea.sflag [#allocation7], %s367
        %s369 = sand.u32 %s86, 1
        %s370 = smul.addr %s369, 32
        %s371 = scalar_lea.vmem [#allocation6], %s370
        // Predicated region
        $region49: #{tpu_custom_call.1} parent=43 // pred_check
          %p372 = pneg %p99
        $region50: #{tpu_custom_call.1} parent=43 // pred_check_branch
          %374 = sbr.rel (%p372) target = $region52
        $region51: #{tpu_custom_call.1} parent=43 // pred_region
          %376 = dma.done %s368, 512
        $region52: #{tpu_custom_call.1} parent=43 // pred_fallthru
          _
        %s377 = sand.u32 %s29, 1
        %s378 = scalar_lea.sflag [#allocation7], %s377
        %s379 = sand.u32 %s114, 1
        %s380 = smul.addr %s379, 32
        %s381 = scalar_lea.vmem [#allocation8], %s380
        // Predicated region
        $region53: #{tpu_custom_call.1} parent=43 // pred_check
          %p382 = pneg %p127
        $region54: #{tpu_custom_call.1} parent=43 // pred_check_branch
          %384 = sbr.rel (%p382) target = $region56
        $region55: #{tpu_custom_call.1} parent=43 // pred_region
          %386 = dma.done %s378, 512
        $region56: #{tpu_custom_call.1} parent=43 // pred_fallthru
          _
        %s387 = sand.u32 %s29, 1
        %s388 = scalar_lea.sflag [#allocation10], %s387
        %s389 = sand.u32 %s142, 1
        %s390 = smul.addr %s389, 32
        %s391 = scalar_lea.vmem [#allocation9], %s390
        // Predicated region
        $region57: #{tpu_custom_call.1} parent=43 // pred_check
          %p392 = pneg %p155
        $region58: #{tpu_custom_call.1} parent=43 // pred_check_branch
          %394 = sbr.rel (%p392) target = $region60
        $region59: #{tpu_custom_call.1} parent=43 // pred_region
          %396 = dma.done %s388, 512
        $region60: #{tpu_custom_call.1} parent=43 // pred_fallthru
          _
        // Predicated region
        $region61: #{tpu_custom_call.1} parent=43 // pred_check
          %p397 = pneg %p176
        $region62: #{tpu_custom_call.1} parent=43 // pred_check_branch
          %399 = sbr.rel (%p397) target = $region64
        $region63: #{tpu_custom_call.1} parent=43 // pred_region
          %401 = dma.done [#allocation10], 512
        $region64: #{tpu_custom_call.1} parent=43 // pred_fallthru
          _
        %s402 = sand.u32 %s56, 1
        %s403 = scalar_lea.sflag [#allocation4], %s402
        %s404 = sand.u32 %s56, 1
        %s405 = scalar_lea.vmem [#allocation3], %s404
        %p406 = pneg %p69
        %p407 = pneg %p66
        %s408 = sand.u32 %s29, 1
        %s409 = scalar_lea.sflag [#allocation7], %s408
        %s410 = sand.u32 %s86, 1
        %s411 = smul.addr %s410, 32
        %s412 = scalar_lea.vmem [#allocation6], %s411
        %p413 = pneg %p99
        %p414 = pneg %p96
        %s415 = sand.u32 %s29, 1
        %s416 = scalar_lea.sflag [#allocation7], %s415
        %s417 = sand.u32 %s114, 1
        %s418 = smul.addr %s417, 32
        %s419 = scalar_lea.vmem [#allocation8], %s418
        %p420 = pneg %p127
        %p421 = pneg %p124
        %s422 = sand.u32 %s29, 1
        %s423 = scalar_lea.sflag [#allocation10], %s422
        %s424 = sand.u32 %s142, 1
        %s425 = smul.addr %s424, 32
        %s426 = scalar_lea.vmem [#allocation9], %s425
        %p427 = pneg %p155
        %p428 = pneg %p152
        %p429 = pneg %p176
        %p430 = pneg %p173
        %p431 = pneg %p197
        %p432 = pneg %p194
        %p433 = pneg %p225
        %p434 = pneg %p222
        %s435 = sand.u32 %s212, 1
        %s436 = scalar_lea.sflag [#allocation5], %s435
        %s437 = sand.u32 %s212, 1
        %s438 = smul.addr %s437, 8
        %s439 = scalar_lea.vmem [#allocation12], %s438
        %s440 = smul.u32 4, %s36
        %s441 = smul.u32 4, %s36
        %s442 = smul.u32 4, %s36
        %v443 = vlaneseq
        %v444 = vshrl.u32 %v443, 7
        %s445 = smul.u32 %s35, 8
        %v446 = vstv %s445
        %v447 = vadd.s32 %v444, %v446
        %v448 = vlaneseq
        %v449 = vand.u32 %v448, 127
        %vm450 = vcmp.le.s32.totalorder %v449, %v447
        %v451 = vld [vmem:[%s361] sm:$0x1]
        %vm452 = vcmp.ne.f32.partialorder %v451, 0.0
        %v453 = vsel %vm452, 1, 0
        %v454 = vperm.slane %v453, 0
        %vm455 = vcmp.eq.s32.totalorder %v454, 1
        %vm456 = vmand %vm450, %vm455
        %v457 = vld [vmem:[%s371] sm:$0xff]
        %v458 = vld [vmem:[%s381] sm:$0xff]
        %v459 = vld [vmem:[%s391] sm:$0xff]
        %vm460 = vcmask 64512
        %v462 = vsel %vm460, %v457, 0
        %v465 = vsel %vm460, %v458, 0
        %467 = vmatpush.xpose.msra.mxu0 0.0
        %468 = vmatpush.xpose.msra.mxu0 0.0
        %469 = vmatpush.xpose.msra.mxu0 0.0
        %470 = vmatpush.xpose.msra.mxu0 0.0
        %471 = vmatpush.xpose.msra.mxu0 0.0
        %472 = vmatpush.xpose.msra.mxu0 0.0
        %473 = vmatpush.xpose.msra.mxu0 0.0
        %474 = vmatpush.xpose.msra.mxu0 0.0
        %475 = vmatpush.xpose.msra.mxu0 0.0
        %476 = vmatpush.xpose.msra.mxu0 0.0
        %477 = vmatpush.xpose.msra.mxu0 0.0
        %478 = vmatpush.xpose.msra.mxu0 0.0
        %479 = vmatpush.xpose.msra.mxu0 0.0
        %480 = vmatpush.xpose.msra.mxu0 0.0
        %481 = vmatpush.xpose.msra.mxu0 0.0
        %482 = vmatpush.xpose.msra.mxu0 %v465
        %483 = vmatmul.f32.gmra.mxu0 %v462
        %v484 = vpop.f32.mrf.mxu0
        %v485 = vadd.f32 0.0, %v484
        %486 = vdwg.mxu0
        %v487 = vsel %vm456, %v485, -1000000.0
        %v488 = vsel %vm460, %v487, -inf
        %489 = vmax.xlane.f32.xlu0 %v488
        %v490 = vpop.xlane.xlu0 %489
        %v491 = vsub.f32 %v487, %v490
        %v492 = vmul.f32 %v491, 1.442695
        %v493 = vpow.pop %v492
        %v494 = vsel %vm460, %v493, 0.0
        %495 = vadd.xlane.f32.xlu0 %v494
        %v496 = vpop.xlane.xlu0 %495
        %v497 = vrcp.pop %v496
        %v498 = vmul.f32 %v496, %v497
        %v499 = vsub.f32 1.0, %v498
        %v500 = vmul.f32 %v497, %v499
        %v501 = vadd.f32 %v497, %v500
        %vm502 = vweird.f32 %v496
        %vm503 = vweird.f32 %v497
        %vm504 = vmor %vm502, %vm503
        %v505 = vsel %vm504, %v497, %v501
        %v506 = vand.u32 2147483647, %v496
        %vm507 = vcmp.eq.f32.partialorder %v506, 8.507059e+37
        %v508 = vand.u32 %v496, 2147483648
        %v509 = vor.u32 1.1754944e-38, %v508
        %v510 = vsel %vm507, %v509, %v505
        %v511 = vmul.f32 %v493, %v510
        %v513 = vsel %vm460, %v511, 0
        %515 = vmatpush.msra.mxu0 0.0
        %516 = vmatpush.msra.mxu0 0.0
        %517 = vmatpush.msra.mxu0 0.0
        %518 = vmatpush.msra.mxu0 0.0
        %519 = vmatpush.msra.mxu0 0.0
        %520 = vmatpush.msra.mxu0 0.0
        %521 = vmatpush.msra.mxu0 0.0
        %522 = vmatpush.msra.mxu0 0.0
        %523 = vmatpush.msra.mxu0 0.0
        %524 = vmatpush.msra.mxu0 0.0
        %525 = vmatpush.msra.mxu0 0.0
        %526 = vmatpush.msra.mxu0 0.0
        %527 = vmatpush.msra.mxu0 0.0
        %528 = vmatpush.msra.mxu0 0.0
        %529 = vmatpush.msra.mxu0 0.0
        %530 = vmatpush.msra.mxu0 %v459
        %531 = vmatmul.f32.gmra.mxu0 %v513
        %v532 = vpop.f32.mrf.mxu0
        %v533 = vadd.f32 0.0, %v532
        %534 = vdwg.mxu0
        %s535 = scalar_lea.vmem %s371, 8 [#allocation6]
        %v536 = vld [vmem:[%s535] sm:$0xff]
        %s537 = scalar_lea.vmem %s381, 8 [#allocation8]
        %v538 = vld [vmem:[%s537] sm:$0xff]
        %s539 = scalar_lea.vmem %s391, 8 [#allocation9]
        %v540 = vld [vmem:[%s539] sm:$0xff]
        %v542 = vsel %vm460, %v536, 0
        %v545 = vsel %vm460, %v538, 0
        %547 = vmatpush.xpose.msra.mxu0 0.0
        %548 = vmatpush.xpose.msra.mxu0 0.0
        %549 = vmatpush.xpose.msra.mxu0 0.0
        %550 = vmatpush.xpose.msra.mxu0 0.0
        %551 = vmatpush.xpose.msra.mxu0 0.0
        %552 = vmatpush.xpose.msra.mxu0 0.0
        %553 = vmatpush.xpose.msra.mxu0 0.0
        %554 = vmatpush.xpose.msra.mxu0 0.0
        %555 = vmatpush.xpose.msra.mxu0 0.0
        %556 = vmatpush.xpose.msra.mxu0 0.0
        %557 = vmatpush.xpose.msra.mxu0 0.0
        %558 = vmatpush.xpose.msra.mxu0 0.0
        %559 = vmatpush.xpose.msra.mxu0 0.0
        %560 = vmatpush.xpose.msra.mxu0 0.0
        %561 = vmatpush.xpose.msra.mxu0 0.0
        %562 = vmatpush.xpose.msra.mxu0 %v545
        %563 = vmatmul.f32.gmra.mxu0 %v542
        %v564 = vpop.f32.mrf.mxu0
        %v565 = vadd.f32 0.0, %v564
        %566 = vdwg.mxu0
        %v567 = vsel %vm456, %v565, -1000000.0
        %v568 = vsel %vm460, %v567, -inf
        %569 = vmax.xlane.f32.xlu0 %v568
        %v570 = vpop.xlane.xlu0 %569
        %v571 = vsub.f32 %v567, %v570
        %v572 = vmul.f32 %v571, 1.442695
        %v573 = vpow.pop %v572
        %v574 = vsel %vm460, %v573, 0.0
        %575 = vadd.xlane.f32.xlu0 %v574
        %v576 = vpop.xlane.xlu0 %575
        %v577 = vrcp.pop %v576
        %v578 = vmul.f32 %v576, %v577
        %v579 = vsub.f32 1.0, %v578
        %v580 = vmul.f32 %v577, %v579
        %v581 = vadd.f32 %v577, %v580
        %vm582 = vweird.f32 %v576
        %vm583 = vweird.f32 %v577
        %vm584 = vmor %vm582, %vm583
        %v585 = vsel %vm584, %v577, %v581
        %v586 = vand.u32 2147483647, %v576
        %vm587 = vcmp.eq.f32.partialorder %v586, 8.507059e+37
        %v588 = vand.u32 %v576, 2147483648
        %v589 = vor.u32 1.1754944e-38, %v588
        %v590 = vsel %vm587, %v589, %v585
        %v591 = vmul.f32 %v573, %v590
        %v593 = vsel %vm460, %v591, 0
        %595 = vmatpush.msra.mxu0 0.0
        %596 = vmatpush.msra.mxu0 0.0
        %597 = vmatpush.msra.mxu0 0.0
        %598 = vmatpush.msra.mxu0 0.0
        %599 = vmatpush.msra.mxu0 0.0
        %600 = vmatpush.msra.mxu0 0.0
        %601 = vmatpush.msra.mxu0 0.0
        %602 = vmatpush.msra.mxu0 0.0
        %603 = vmatpush.msra.mxu0 0.0
        %604 = vmatpush.msra.mxu0 0.0
        %605 = vmatpush.msra.mxu0 0.0
        %606 = vmatpush.msra.mxu0 0.0
        %607 = vmatpush.msra.mxu0 0.0
        %608 = vmatpush.msra.mxu0 0.0
        %609 = vmatpush.msra.mxu0 0.0
        %610 = vmatpush.msra.mxu0 %v540
        %611 = vmatmul.f32.gmra.mxu0 %v593
        %v612 = vpop.f32.mrf.mxu0
        %v613 = vadd.f32 0.0, %v612
        %614 = vdwg.mxu0
        %s615 = scalar_lea.vmem %s371, 16 [#allocation6]
        %v616 = vld [vmem:[%s615] sm:$0xff]
        %s617 = scalar_lea.vmem %s381, 16 [#allocation8]
        %v618 = vld [vmem:[%s617] sm:$0xff]
        %s619 = scalar_lea.vmem %s391, 16 [#allocation9]
        %v620 = vld [vmem:[%s619] sm:$0xff]
        %v622 = vsel %vm460, %v616, 0
        %v625 = vsel %vm460, %v618, 0
        %627 = vmatpush.xpose.msra.mxu0 0.0
        %628 = vmatpush.xpose.msra.mxu0 0.0
        %629 = vmatpush.xpose.msra.mxu0 0.0
        %630 = vmatpush.xpose.msra.mxu0 0.0
        %631 = vmatpush.xpose.msra.mxu0 0.0
        %632 = vmatpush.xpose.msra.mxu0 0.0
        %633 = vmatpush.xpose.msra.mxu0 0.0
        %634 = vmatpush.xpose.msra.mxu0 0.0
        %635 = vmatpush.xpose.msra.mxu0 0.0
        %636 = vmatpush.xpose.msra.mxu0 0.0
        %637 = vmatpush.xpose.msra.mxu0 0.0
        %638 = vmatpush.xpose.msra.mxu0 0.0
        %639 = vmatpush.xpose.msra.mxu0 0.0
        %640 = vmatpush.xpose.msra.mxu0 0.0
        %641 = vmatpush.xpose.msra.mxu0 0.0
        %642 = vmatpush.xpose.msra.mxu0 %v625
        %643 = vmatmul.f32.gmra.mxu0 %v622
        %v644 = vpop.f32.mrf.mxu0
        %v645 = vadd.f32 0.0, %v644
        %646 = vdwg.mxu0
        %v647 = vsel %vm456, %v645, -1000000.0
        %v648 = vsel %vm460, %v647, -inf
        %649 = vmax.xlane.f32.xlu0 %v648
        %v650 = vpop.xlane.xlu0 %649
        %v651 = vsub.f32 %v647, %v650
        %v652 = vmul.f32 %v651, 1.442695
        %v653 = vpow.pop %v652
        %v654 = vsel %vm460, %v653, 0.0
        %655 = vadd.xlane.f32.xlu0 %v654
        %v656 = vpop.xlane.xlu0 %655
        %v657 = vrcp.pop %v656
        %v658 = vmul.f32 %v656, %v657
        %v659 = vsub.f32 1.0, %v658
        %v660 = vmul.f32 %v657, %v659
        %v661 = vadd.f32 %v657, %v660
        %vm662 = vweird.f32 %v656
        %vm663 = vweird.f32 %v657
        %vm664 = vmor %vm662, %vm663
        %v665 = vsel %vm664, %v657, %v661
        %v666 = vand.u32 2147483647, %v656
        %vm667 = vcmp.eq.f32.partialorder %v666, 8.507059e+37
        %v668 = vand.u32 %v656, 2147483648
        %v669 = vor.u32 1.1754944e-38, %v668
        %v670 = vsel %vm667, %v669, %v665
        %v671 = vmul.f32 %v653, %v670
        %v673 = vsel %vm460, %v671, 0
        %675 = vmatpush.msra.mxu0 0.0
        %676 = vmatpush.msra.mxu0 0.0
        %677 = vmatpush.msra.mxu0 0.0
        %678 = vmatpush.msra.mxu0 0.0
        %679 = vmatpush.msra.mxu0 0.0
        %680 = vmatpush.msra.mxu0 0.0
        %681 = vmatpush.msra.mxu0 0.0
        %682 = vmatpush.msra.mxu0 0.0
        %683 = vmatpush.msra.mxu0 0.0
        %684 = vmatpush.msra.mxu0 0.0
        %685 = vmatpush.msra.mxu0 0.0
        %686 = vmatpush.msra.mxu0 0.0
        %687 = vmatpush.msra.mxu0 0.0
        %688 = vmatpush.msra.mxu0 0.0
        %689 = vmatpush.msra.mxu0 0.0
        %690 = vmatpush.msra.mxu0 %v620
        %691 = vmatmul.f32.gmra.mxu0 %v673
        %v692 = vpop.f32.mrf.mxu0
        %v693 = vadd.f32 0.0, %v692
        %694 = vdwg.mxu0
        %s695 = scalar_lea.vmem %s371, 24 [#allocation6]
        %v696 = vld [vmem:[%s695] sm:$0xff]
        %s697 = scalar_lea.vmem %s381, 24 [#allocation8]
        %v698 = vld [vmem:[%s697] sm:$0xff]
        %s699 = scalar_lea.vmem %s391, 24 [#allocation9]
        %v700 = vld [vmem:[%s699] sm:$0xff]
        %v702 = vsel %vm460, %v696, 0
        %v705 = vsel %vm460, %v698, 0
        %707 = vmatpush.xpose.msra.mxu0 0.0
        %708 = vmatpush.xpose.msra.mxu0 0.0
        %709 = vmatpush.xpose.msra.mxu0 0.0
        %710 = vmatpush.xpose.msra.mxu0 0.0
        %711 = vmatpush.xpose.msra.mxu0 0.0
        %712 = vmatpush.xpose.msra.mxu0 0.0
        %713 = vmatpush.xpose.msra.mxu0 0.0
        %714 = vmatpush.xpose.msra.mxu0 0.0
        %715 = vmatpush.xpose.msra.mxu0 0.0
        %716 = vmatpush.xpose.msra.mxu0 0.0
        %717 = vmatpush.xpose.msra.mxu0 0.0
        %718 = vmatpush.xpose.msra.mxu0 0.0
        %719 = vmatpush.xpose.msra.mxu0 0.0
        %720 = vmatpush.xpose.msra.mxu0 0.0
        %721 = vmatpush.xpose.msra.mxu0 0.0
        %722 = vmatpush.xpose.msra.mxu0 %v705
        %723 = vmatmul.f32.gmra.mxu0 %v702
        %v724 = vpop.f32.mrf.mxu0
        %v725 = vadd.f32 0.0, %v724
        %726 = vdwg.mxu0
        %v727 = vsel %vm456, %v725, -1000000.0
        %v728 = vsel %vm460, %v727, -inf
        %729 = vmax.xlane.f32.xlu0 %v728
        %v730 = vpop.xlane.xlu0 %729
        %v731 = vsub.f32 %v727, %v730
        %v732 = vmul.f32 %v731, 1.442695
        %v733 = vpow.pop %v732
        %v734 = vsel %vm460, %v733, 0.0
        %735 = vadd.xlane.f32.xlu0 %v734
        %v736 = vpop.xlane.xlu0 %735
        %v737 = vrcp.pop %v736
        %v738 = vmul.f32 %v736, %v737
        %v739 = vsub.f32 1.0, %v738
        %v740 = vmul.f32 %v737, %v739
        %v741 = vadd.f32 %v737, %v740
        %vm742 = vweird.f32 %v736
        %vm743 = vweird.f32 %v737
        %vm744 = vmor %vm742, %vm743
        %v745 = vsel %vm744, %v737, %v741
        %v746 = vand.u32 2147483647, %v736
        %vm747 = vcmp.eq.f32.partialorder %v746, 8.507059e+37
        %v748 = vand.u32 %v736, 2147483648
        %v749 = vor.u32 1.1754944e-38, %v748
        %v750 = vsel %vm747, %v749, %v745
        %v751 = vmul.f32 %v733, %v750
        %v753 = vsel %vm460, %v751, 0
        %755 = vmatpush.msra.mxu0 0.0
        %756 = vmatpush.msra.mxu0 0.0
        %757 = vmatpush.msra.mxu0 0.0
        %758 = vmatpush.msra.mxu0 0.0
        %759 = vmatpush.msra.mxu0 0.0
        %760 = vmatpush.msra.mxu0 0.0
        %761 = vmatpush.msra.mxu0 0.0
        %762 = vmatpush.msra.mxu0 0.0
        %763 = vmatpush.msra.mxu0 0.0
        %764 = vmatpush.msra.mxu0 0.0
        %765 = vmatpush.msra.mxu0 0.0
        %766 = vmatpush.msra.mxu0 0.0
        %767 = vmatpush.msra.mxu0 0.0
        %768 = vmatpush.msra.mxu0 0.0
        %769 = vmatpush.msra.mxu0 0.0
        %770 = vmatpush.msra.mxu0 %v700
        %771 = vmatmul.f32.gmra.mxu0 %v753
        %v772 = vpop.f32.mrf.mxu0
        %v773 = vadd.f32 0.0, %v772
        %774 = vdwg.mxu0
        %776 = vrot.lane.b32.xlu0 %v613, 8
        %v777 = vpop.permute.xlu0 %776
        %780 = vrot.lane.b32.xlu0 %v693, 16
        %v781 = vpop.permute.xlu0 %780
        %784 = vrot.lane.b32.xlu0 %v773, 24
        %v785 = vpop.permute.xlu0 %784
        %v787 = vsel %vm460, %v533, %v777
        %vm788 = vcmask 130048
        %v789 = vsel %vm788, %v787, %v781
        %vm790 = vcmask 195584
        %v791 = vsel %vm790, %v789, %v785
        %vm792 = vcmask 261120
        %793 = vst.msk [vmem:[#allocation2] sm:$0xff] %vm792, %v791
        %v794 = vld [vmem:[#allocation2] sm:$0xff]
        %v795 = vld [vmem:[#allocation11] sm:$0xff]
        %v796 = vld [vmem:[#allocation11 + $0x8] sm:$0xff]
        %v797 = vld [vmem:[#allocation11 + $0x10] sm:$0xff]
        %v798 = vld [vmem:[#allocation11 + $0x18] sm:$0xff]
        %v799 = vld [vmem:[%s5] sm:$0x1]
        %v801 = vperm.slane %v799, 0
        %v804 = vsel %vm792, %v794, 0
        %806 = vmatpush.msra.mxu0 0.0
        %807 = vmatpush.msra.mxu0 0.0
        %808 = vmatpush.msra.mxu0 0.0
        %809 = vmatpush.msra.mxu0 0.0
        %810 = vmatpush.msra.mxu0 0.0
        %811 = vmatpush.msra.mxu0 0.0
        %812 = vmatpush.msra.mxu0 0.0
        %813 = vmatpush.msra.mxu0 0.0
        %814 = vmatpush.msra.mxu0 0.0
        %815 = vmatpush.msra.mxu0 0.0
        %816 = vmatpush.msra.mxu0 0.0
        %817 = vmatpush.msra.mxu0 0.0
        %818 = vmatpush.msra.mxu0 %v798
        %819 = vmatpush.msra.mxu0 %v797
        %820 = vmatpush.msra.mxu0 %v796
        %821 = vmatpush.msra.mxu0 %v795
        %822 = vmatmul.f32.gmra.mxu0 %v804
        %v823 = vpop.f32.mrf.mxu0
        %v824 = vadd.f32 %v801, %v823
        %825 = vdwg.mxu0
        %826 = vst.msk [vmem:[%s439] sm:$0xff] %vm792, %v824
        %s827 = sand.u32 %s212, 1
        %s828 = scalar_lea.sflag [#allocation5], %s827
        %s829 = sand.u32 %s212, 1
        %s830 = smul.addr %s829, 8
        %s831 = scalar_lea.vmem [#allocation12], %s830
        // Predicated region
        $region65: #{tpu_custom_call.1} parent=43 // pred_check
          %p832 = pneg %p222
        $region66: #{tpu_custom_call.1} parent=43 // pred_check_branch
          %834 = sbr.rel (%p832) target = $region68
        $region67: #{tpu_custom_call.1} parent=43 // pred_region
          %836 = vsyncadd %s828, 0
          %s837 = sadd.s32 %s35, %s34
          %s838 = smul.addr %s837, 8
          %s839 = scalar_lea.hbm %s6, %s838
          %s841 = sshll.u32 %s831, 4
          %s842 = int_to_ptr.vmem [resolvable:$true] %s841
          %s843 = sshll.u32 %s839, 4
          %s844 = int_to_ptr.hbm [resolvable:$true] %s843
          %846 = dma.vmem_to_hbm [thread:$0]  %s842, 128, %s844, %s828
        $region68: #{tpu_custom_call.1} parent=43 // pred_fallthru
          _
      $region44: #{tpu_custom_call.1} parent=5 // pred_fallthru
        _
      %p847 = scmp.le.s32.totalorder 2, %s24
      // Predicated region
      $region69: #{tpu_custom_call.1} parent=5 // pred_check
        %p848 = pneg %p847
      $region70: #{tpu_custom_call.1} parent=5 // pred_check_branch
        %850 = sbr.rel (%p848) target = $region72
      $region71: #{tpu_custom_call.1} parent=5 // pred_region
        %s851 = ssub.s32 %s24, 2
        // Predicated region
        $region73: #{tpu_custom_call.1} parent=71 // pred_check
          %p852 = pneg %p228
        $region74: #{tpu_custom_call.1} parent=71 // pred_check_branch
          %854 = sbr.rel (%p852) target = $region76
        $region75: #{tpu_custom_call.1} parent=71 // pred_region
          %s855 = sand.u32 %s213, 1
          %s856 = scalar_lea.sflag [#allocation5], %s855
          %s857 = sand.u32 %s213, 1
          %s858 = smul.addr %s857, 8
          %s859 = scalar_lea.vmem [#allocation12], %s858
          %861 = dma.done %s856, 128
        $region76: #{tpu_custom_call.1} parent=71 // pred_fallthru
          _
      $region72: #{tpu_custom_call.1} parent=5 // pred_fallthru
        _
    $region6: #{tpu_custom_call.1} parent=1 // loop_footer
      %s28 = sadd.s32 1, %s24
    $region7: #{tpu_custom_call.1} parent=1 // loop_footer_branch
      %23 = sbr.rel target = $region3
    $region8: #{tpu_custom_call.1} parent=1 // loop_exit
      _
    %862 = vsyncpa [#allocation4], 1
    %s863 = scalar_lea.sflag [#allocation4], 1
    %864 = vsyncpa %s863, 1
    %865 = vsyncpa [#allocation7], 1
    %s866 = scalar_lea.sflag [#allocation7], 1
    %867 = vsyncpa %s866, 1
    %868 = vsyncpa [#allocation10], 1
    %s869 = scalar_lea.sflag [#allocation10], 1
    %870 = vsyncpa %s869, 1
    %871 = vsyncpa [#allocation5], 1
    %s872 = scalar_lea.sflag [#allocation5], 1
    %873 = vsyncpa %s872, 1

</llo_original>
